<compile_context>
chip_gen: v5e
topology: v5e:2x2
jax: 0.10.0
libtpu: 0.0.40
codegen_flags: <defaults>
</compile_context>

<pallas_src>
import functools

import jax
import jax.numpy as jnp
from jax.experimental import pallas as pl
from jax.experimental.pallas import tpu as pltpu


def _round_up(x, m):
    return ((x + m - 1) // m) * m


def _band_footprint(tm, wp, cin_p, oc_p):
    """Rough per-grid-step VMEM footprint (bytes) for a TM-row band."""
    br = tm + 2 * wp + 16
    return (2 * br * cin_p * 2                 # double-buffered input band (bf16)
            + 2 * tm * oc_p * 2                # double-buffered output band (bf16)
            + br * cin_p * 4                   # f32 upcast of the band
            + (tm + 2 * wp) * 3 * cin_p * 2    # dx-expanded bf16 lhs
            + 2 * tm * oc_p * 4                # f32 accumulator + epilogue temp
            + 2 * 3 * (3 * cin_p) * oc_p * 2)  # weights (2 buffers)


def _pick_tm(rows, wp, cin_p, oc_p, budget=16 * 1024 * 1024):
    """Largest TM (multiple of 16) whose band footprint fits the VMEM budget."""
    rows16 = _round_up(rows, 16)
    best = 16
    for tm in (16, 32, 64, 128, 256, 512, 1024, 2048):
        if _band_footprint(tm, wp, cin_p, oc_p) <= budget:
            best = tm
        if tm >= rows16:
            break
    return min(best, rows16)


def _spdconv_kernel(xb_ref, w_ref, affine_ref, o_ref, *, tm, wp):
    # xb_ref:     (1, 1, BR, Cin_p)   bf16  halo'd input band, BR = tm + 2*wp + 16
    # w_ref:      (3, 3*Cin_p, OC_p)  bf16  dy-major weights, K index = dx*Cin_p + cin
    # affine_ref: (2, OC_p)           f32   row 0 = BN scale, row 1 = BN shift
    # o_ref:      (1, tm, OC_p)       bf16  output band (flat rows q = h*Wp + w)
    oc_p = o_ref.shape[2]
    bru = tm + 2 * wp

    band = xb_ref[0, 0]                              # (BR, Cin_p) bf16, aligned full read
    band32 = band.astype(jnp.float32)
    # dx expansion (fold the 3 column taps into the matmul K dim).  The 1-/2-row shifts
    # are done in f32 (cheap 32-bit sublane shifts), then cast back to bf16 for the MXU.
    parts = [band32[dx:dx + bru, :].astype(jnp.bfloat16) for dx in range(3)]
    lhs_all = jnp.concatenate(parts, axis=1)         # (bru, 3*Cin_p) bf16

    acc = jnp.zeros((tm, oc_p), jnp.float32)
    for dy in range(3):                              # dy -> aligned row-offset reads (wp % 16 == 0)
        lhs = lhs_all[dy * wp:dy * wp + tm, :]
        acc = acc + jnp.dot(lhs, w_ref[dy], preferred_element_type=jnp.float32)

    # Inference BatchNorm applied in f32, then SiLU (exp -> EUP), then bf16 store.
    y = acc * affine_ref[0:1, :] + affine_ref[1:2, :]
    y = y * (1.0 / (1.0 + jnp.exp(-y)))
    o_ref[...] = y.reshape(1, tm, oc_p).astype(o_ref.dtype)


def spdconv(x_nchw, weight_hwio, gamma, beta, run_mean, run_var, eps=1e-5):
    """SPDConv forward (inference).

    x_nchw:      (N, C, H, W) with H, W even
    weight_hwio: (3, 3, 4*C, OC)
    returns:     (N, OC, H//2, W//2)
    """
    N, C, H, W = x_nchw.shape
    OC = weight_hwio.shape[-1]
    assert H % 2 == 0 and W % 2 == 0, "SPDConv needs even spatial dims"
    H2, W2 = H // 2, W // 2
    Cin = 4 * C
    assert weight_hwio.shape == (3, 3, Cin, OC)

    # ---- padded geometry: lane-dense channels, 16-row-aligned padded width -------------
    Cin_p = _round_up(Cin, 128)
    OC_p = _round_up(OC, 128)
    Hp = H2 + 2                              # conv pad=1 top/bottom
    Wp = _round_up(W2 + 2, 16)               # conv pad=1 left + zero fill right

    TM = _pick_tm(H2 * Wp, Wp, Cin_p, OC_p)  # output rows (flat) per grid step
    T = pl.cdiv(H2 * Wp, TM)                 # row tiles per frame
    Mo = T * TM                              # padded flat output rows per frame
    BR = TM + 2 * Wp + 16                    # band rows = TM + conv halo (+ slack)
    Mi = Mo + 2 * Wp + 16                    # padded flat input rows per frame

    # ---- space-to-depth, matching torch.cat([::2,::2],[1::2,::2],[::2,1::2],[1::2,1::2],1)
    xs = x_nchw.reshape(N, C, H2, 2, W2, 2)              # (N, C, H2, sy, W2, sx)
    xs = jnp.transpose(xs, (0, 2, 4, 5, 3, 1))           # (N, H2, W2, sx, sy, C)
    xs = xs.reshape(N, H2, W2, Cin).astype(jnp.bfloat16)  # channel k = 2C*sx + C*sy + c

    # ---- zero halo + lane padding, flatten rows, pre-block into overlapping halo'd bands
    xpad = jnp.pad(xs, ((0, 0), (1, 1), (1, Wp - W2 - 1), (0, Cin_p - Cin)))
    xflat = xpad.reshape(N, Hp * Wp, Cin_p)
    xflat = jnp.pad(xflat, ((0, 0), (0, Mi - Hp * Wp), (0, 0)))
    xb = jnp.stack([xflat[:, t * TM:t * TM + BR, :] for t in range(T)], axis=1)  # (N,T,BR,Cin_p)

    # ---- weights (unscaled bf16, K = dx*Cin_p + cin) + BN affine (f32 epilogue) ---------
    w_f = jnp.pad(weight_hwio.astype(jnp.float32),
                  ((0, 0), (0, 0), (0, Cin_p - Cin), (0, OC_p - OC)))   # (3,3,Cin_p,OC_p)
    w3 = w_f.reshape(3, 3 * Cin_p, OC_p).astype(jnp.bfloat16)
    scale = gamma / jnp.sqrt(run_var + eps)
    shift = beta - run_mean * scale
    affine = jnp.stack([jnp.pad(scale, (0, OC_p - OC)),
                        jnp.pad(shift, (0, OC_p - OC))]).astype(jnp.float32)      # (2, OC_p)

    fp = _band_footprint(TM, Wp, Cin_p, OC_p)
    vmem_limit = int(min(max(2 * fp, 32 * 1024 * 1024), 56 * 1024 * 1024))

    kernel = functools.partial(_spdconv_kernel, tm=TM, wp=Wp)
    out_flat = pl.pallas_call(
        kernel,
        out_shape=jax.ShapeDtypeStruct((N, Mo, OC_p), jnp.bfloat16),
        grid_spec=pltpu.PrefetchScalarGridSpec(
            num_scalar_prefetch=0,
            grid=(N, T),
            in_specs=[
                pl.BlockSpec((1, 1, BR, Cin_p), lambda n, t: (n, t, 0, 0)),
                pl.BlockSpec((3, 3 * Cin_p, OC_p), lambda n, t: (0, 0, 0)),
                pl.BlockSpec((2, OC_p), lambda n, t: (0, 0)),
            ],
            out_specs=pl.BlockSpec((1, TM, OC_p), lambda n, t: (n, t, 0)),
        ),
        compiler_params=pltpu.CompilerParams(
            dimension_semantics=("parallel", "parallel"),
            vmem_limit_bytes=vmem_limit),
    )(xb, w3, affine)

    # Drop flat-row / channel padding, back to NCHW.
    out = out_flat[:, :H2 * Wp, :].reshape(N, H2, Wp, OC_p)[:, :, :W2, :OC]
    return jnp.transpose(out, (0, 3, 1, 2)).astype(x_nchw.dtype)


def _reference(x_nchw, weight_hwio, gamma, beta, run_mean, run_var, eps=1e-5):
    a = x_nchw[..., ::2, ::2]
    b = x_nchw[..., 1::2, ::2]
    c = x_nchw[..., ::2, 1::2]
    d = x_nchw[..., 1::2, 1::2]
    xs = jnp.concatenate([a, b, c, d], axis=1)
    x_nhwc = jnp.transpose(xs, (0, 2, 3, 1))
    y = jax.lax.conv_general_dilated(
        x_nhwc, weight_hwio, window_strides=(1, 1), padding="SAME",
        dimension_numbers=("NHWC", "HWIO", "NHWC"))
    scale = gamma / jnp.sqrt(run_var + eps)
    shift = beta - run_mean * scale
    y = y * scale + shift
    y = y * jax.nn.sigmoid(y)
    return jnp.transpose(y, (0, 3, 1, 2))


if __name__ == "__main__":
    key = jax.random.PRNGKey(0)
    N, C, H, W = 2, 4, 16, 16
    OC = 8
    Cin = 4 * C

    k_x, k_w, k_g, k_b, k_m, k_v = jax.random.split(key, 6)
    x = jax.random.normal(k_x, (N, C, H, W), dtype=jnp.float32)
    weight = jax.random.normal(k_w, (3, 3, Cin, OC), dtype=jnp.float32) * 0.1
    gamma = 1.0 + 0.1 * jax.random.normal(k_g, (OC,), dtype=jnp.float32)
    beta = 0.1 * jax.random.normal(k_b, (OC,), dtype=jnp.float32)
    run_mean = 0.1 * jax.random.normal(k_m, (OC,), dtype=jnp.float32)
    run_var = jnp.abs(1.0 + 0.1 * jax.random.normal(k_v, (OC,), dtype=jnp.float32))

    fwd = jax.jit(spdconv)
    out = jax.block_until_ready(fwd(x, weight, gamma, beta, run_mean, run_var))

    ref = _reference(x, weight, gamma, beta, run_mean, run_var)
    assert out.shape == (N, OC, H // 2, W // 2), out.shape
    # bf16 MXU operands (f32 accumulation) vs an f32 reference -> slightly looser tolerance.
    err = float(jnp.max(jnp.abs(out - ref)))
    assert jnp.allclose(out, ref, atol=5e-2, rtol=5e-2), err

    print("KERNEL_OK")
</pallas_src>

<mosaic_0001>
module attributes {stable_mosaic.version = 11 : i64} {
  func.func @_spdconv_kernel(%arg0: i32, %arg1: i32, %arg2: memref<1x1x176x128xbf16, #tpu.memory_space<vmem>>, %arg3: memref<3x384x128xbf16, #tpu.memory_space<vmem>>, %arg4: memref<2x128xf32, #tpu.memory_space<vmem>>, %arg5: memref<1x128x128xbf16, #tpu.memory_space<vmem>>) attributes {dimension_semantics = [#tpu.dimension_semantics<parallel>, #tpu.dimension_semantics<parallel>], iteration_bounds = array<i64: 2, 1>, scalar_prefetch = 0 : i64, scratch_operands = 0 : i64, tpu.core_type = #tpu.core_type<tc>, window_params = [{transform_indices = @transform_0, window_bounds = array<i64: 1, 1, 176, 128>}, {pipeline_mode = #tpu.pipeline_mode<synchronous>, transform_indices = @transform_1, window_bounds = array<i64: 3, 384, 128>}, {pipeline_mode = #tpu.pipeline_mode<synchronous>, transform_indices = @transform_2, window_bounds = array<i64: 2, 128>}, {transform_indices = @transform_3, window_bounds = array<i64: 1, 128, 128>}]} {
    %c0 = arith.constant 0 : index
    %c0_0 = arith.constant 0 : index
    %c0_1 = arith.constant 0 : index
    %c0_2 = arith.constant 0 : index
    %0 = vector.load %arg2[%c0, %c0_0, %c0_1, %c0_2] : memref<1x1x176x128xbf16, #tpu.memory_space<vmem>>, vector<1x1x176x128xbf16>
    %1 = vector.shape_cast %0 : vector<1x1x176x128xbf16> to vector<176x128xbf16>
    %2 = arith.extf %1 : vector<176x128xbf16> to vector<176x128xf32>
    %3 = vector.extract_strided_slice %2 {offsets = [0, 0], sizes = [160, 128], strides = [1, 1]} : vector<176x128xf32> to vector<160x128xf32>
    %4 = arith.truncf %3 : vector<160x128xf32> to vector<160x128xbf16>
    %5 = vector.extract_strided_slice %2 {offsets = [1, 0], sizes = [160, 128], strides = [1, 1]} : vector<176x128xf32> to vector<160x128xf32>
    %6 = arith.truncf %5 : vector<160x128xf32> to vector<160x128xbf16>
    %7 = vector.extract_strided_slice %2 {offsets = [2, 0], sizes = [160, 128], strides = [1, 1]} : vector<176x128xf32> to vector<160x128xf32>
    %8 = arith.truncf %7 : vector<160x128xf32> to vector<160x128xbf16>
    %9 = tpu.concatenate %4, %6, %8 in 1 : vector<160x128xbf16>, vector<160x128xbf16>, vector<160x128xbf16> -> vector<160x384xbf16>
    %cst = arith.constant 0.000000e+00 : f32
    %10 = vector.broadcast %cst : f32 to vector<128x128xf32>
    %11 = vector.extract_strided_slice %9 {offsets = [0, 0], sizes = [128, 384], strides = [1, 1]} : vector<160x384xbf16> to vector<128x384xbf16>
    %c0_3 = arith.constant 0 : index
    %c0_4 = arith.constant 0 : index
    %c0_5 = arith.constant 0 : index
    %12 = vector.load %arg3[%c0_3, %c0_4, %c0_5] : memref<3x384x128xbf16, #tpu.memory_space<vmem>>, vector<1x384x128xbf16>
    %13 = vector.shape_cast %12 : vector<1x384x128xbf16> to vector<384x128xbf16>
    %cst_6 = arith.constant dense<0.000000e+00> : vector<128x128xf32>
    %14 = tpu.matmul %11, %13, %cst_6 {dimension_numbers = #tpu.dot_dimension_numbers<[1], [0], [0], [1], [0, 0, 1, 1], [], []>} : vector<128x384xbf16>, vector<384x128xbf16>, vector<128x128xf32> -> vector<128x128xf32>
    %15 = arith.addf %10, %14 : vector<128x128xf32>
    %16 = vector.extract_strided_slice %9 {offsets = [16, 0], sizes = [128, 384], strides = [1, 1]} : vector<160x384xbf16> to vector<128x384xbf16>
    %c1 = arith.constant 1 : index
    %c0_7 = arith.constant 0 : index
    %c0_8 = arith.constant 0 : index
    %17 = vector.load %arg3[%c1, %c0_7, %c0_8] : memref<3x384x128xbf16, #tpu.memory_space<vmem>>, vector<1x384x128xbf16>
    %18 = vector.shape_cast %17 : vector<1x384x128xbf16> to vector<384x128xbf16>
    %cst_9 = arith.constant dense<0.000000e+00> : vector<128x128xf32>
    %19 = tpu.matmul %16, %18, %cst_9 {dimension_numbers = #tpu.dot_dimension_numbers<[1], [0], [0], [1], [0, 0, 1, 1], [], []>} : vector<128x384xbf16>, vector<384x128xbf16>, vector<128x128xf32> -> vector<128x128xf32>
    %20 = arith.addf %15, %19 : vector<128x128xf32>
    %21 = vector.extract_strided_slice %9 {offsets = [32, 0], sizes = [128, 384], strides = [1, 1]} : vector<160x384xbf16> to vector<128x384xbf16>
    %c2 = arith.constant 2 : index
    %c0_10 = arith.constant 0 : index
    %c0_11 = arith.constant 0 : index
    %22 = vector.load %arg3[%c2, %c0_10, %c0_11] : memref<3x384x128xbf16, #tpu.memory_space<vmem>>, vector<1x384x128xbf16>
    %23 = vector.shape_cast %22 : vector<1x384x128xbf16> to vector<384x128xbf16>
    %cst_12 = arith.constant dense<0.000000e+00> : vector<128x128xf32>
    %24 = tpu.matmul %21, %23, %cst_12 {dimension_numbers = #tpu.dot_dimension_numbers<[1], [0], [0], [1], [0, 0, 1, 1], [], []>} : vector<128x384xbf16>, vector<384x128xbf16>, vector<128x128xf32> -> vector<128x128xf32>
    %25 = arith.addf %20, %24 : vector<128x128xf32>
    %c0_13 = arith.constant 0 : index
    %c0_14 = arith.constant 0 : index
    %26 = vector.load %arg4[%c0_13, %c0_14] : memref<2x128xf32, #tpu.memory_space<vmem>>, vector<1x128xf32>
    %27 = vector.broadcast %26 : vector<1x128xf32> to vector<128x128xf32>
    %28 = arith.mulf %25, %27 : vector<128x128xf32>
    %c1_15 = arith.constant 1 : index
    %c0_16 = arith.constant 0 : index
    %29 = vector.load %arg4[%c1_15, %c0_16] : memref<2x128xf32, #tpu.memory_space<vmem>>, vector<1x128xf32>
    %30 = vector.broadcast %29 : vector<1x128xf32> to vector<128x128xf32>
    %31 = arith.addf %28, %30 : vector<128x128xf32>
    %cst_17 = arith.constant 0.000000e+00 : f32
    %32 = vector.broadcast %cst_17 : f32 to vector<128x128xf32>
    %33 = arith.subf %32, %31 : vector<128x128xf32>
    %34 = math.exp %33 : vector<128x128xf32>
    %cst_18 = arith.constant 1.000000e+00 : f32
    %35 = vector.broadcast %cst_18 : f32 to vector<128x128xf32>
    %36 = arith.addf %35, %34 : vector<128x128xf32>
    %cst_19 = arith.constant 1.000000e+00 : f32
    %37 = vector.broadcast %cst_19 : f32 to vector<128x128xf32>
    %38 = arith.divf %37, %36 : vector<128x128xf32>
    %39 = arith.mulf %31, %38 : vector<128x128xf32>
    %40 = vector.shape_cast %39 : vector<128x128xf32> to vector<1x128x128xf32>
    %41 = arith.truncf %40 : vector<1x128x128xf32> to vector<1x128x128xbf16>
    %c0_20 = arith.constant 0 : index
    %c0_21 = arith.constant 0 : index
    %c0_22 = arith.constant 0 : index
    %42 = vector.load %arg5[%c0_20, %c0_21, %c0_22] : memref<1x128x128xbf16, #tpu.memory_space<vmem>>, vector<1x128x128xbf16>
    tpu.vector_store %arg5[%c0_20, %c0_21, %c0_22], %41 {strides = array<i32>} : memref<1x128x128xbf16, #tpu.memory_space<vmem>>, vector<1x128x128xbf16>,
    return
  }
  func.func @transform_0(%arg0: i32, %arg1: i32) -> (i32, i32, i32, i32) {
    %c0_i32 = arith.constant 0 : i32
    %c0_i32_0 = arith.constant 0 : i32
    %c0_i32_1 = arith.constant 0 : i32
    return %arg0, %arg1, %c0_i32, %c0_i32_0 : i32, i32, i32, i32
  }
  func.func @transform_1(%arg0: i32, %arg1: i32) -> (i32, i32, i32) {
    %c0_i32 = arith.constant 0 : i32
    %c0_i32_0 = arith.constant 0 : i32
    %c0_i32_1 = arith.constant 0 : i32
    %c0_i32_2 = arith.constant 0 : i32
    return %c0_i32, %c0_i32_0, %c0_i32_1 : i32, i32, i32
  }
  func.func @transform_2(%arg0: i32, %arg1: i32) -> (i32, i32) {
    %c0_i32 = arith.constant 0 : i32
    %c0_i32_0 = arith.constant 0 : i32
    %c0_i32_1 = arith.constant 0 : i32
    return %c0_i32, %c0_i32_0 : i32, i32
  }
  func.func @transform_3(%arg0: i32, %arg1: i32) -> (i32, i32, i32) {
    %c0_i32 = arith.constant 0 : i32
    %c0_i32_0 = arith.constant 0 : i32
    return %arg0, %arg1, %c0_i32 : i32, i32, i32
  }
}

</mosaic_0001>

<llo_original>
// kernel: spdconv.1
$region0: #{spdconv.1}
  #allocation0 [shape = 'u32[]', space=smem, size = 0x4, offset = 0x4, fixed_abs, tag = 'smem constant byte address 0x4 - core index']
  #allocation1 [shape = 'u32[72,128]{1,0:T(1,128)}', space=vmem, size = 0x9000, scoped, tag = 'internal scratch']
  %s0 = inlined_call_operand.vmem [shape: bf16[2,1,176,128], index: 0, kind: input, shape index: {}]
  %s1 = inlined_call_operand.vmem [shape: bf16[3,384,128], index: 1, kind: input, shape index: {}]
  %s2 = inlined_call_operand.vmem [shape: f32[2,128], index: 2, kind: input, shape index: {}]
  %s3 = inlined_call_operand.vmem [shape: bf16[2,128,128], index: 3, kind: output, shape index: {}]
  %s4 = sld [smem:[#allocation0]]
  $region45: #{spdconv.1} parent=0
    _
  %s6 = ssub.s32 1, %s4
  %s7 = scalar_select 0, %s6, %s4
  loop: start=0, step=1, limit=4
  $region2: #{spdconv.1} parent=0 // loop_pre_header
    _
  $region3: #{spdconv.1} parent=0 // loop_header
    %s9 = sphi 0, %s13
    %p10 = scmp.ge.s32.totalorder %s9, 4
    %s16 = sphi 0, %s28
    %s17 = sphi 0, %s24
    %s18 = sphi 0, %s16
    %s19 = sphi 0, %s17
    %s20 = sphi 0, %s18
    %s21 = sphi 0, %s19
    %s33 = sphi 0, %s35
    %s36 = sphi 0, %s33
    %s37 = sphi 0, %s36
    %s53 = sphi 0, %s37
    %s57 = sphi 0, %s57
    %s59 = sphi 0, %s57
    %s60 = sphi 0, %s59
    %s74 = sphi 0, %s60
    %s78 = sphi 0, %s78
    %s80 = sphi 0, %s78
    %s81 = sphi 0, %s80
    %s95 = sphi 0, %s81
    %s103 = sphi 0, %s105
    %s106 = sphi 0, %s103
    %s107 = sphi 0, %s106
    %s123 = sphi 0, %s107
  $region4: #{spdconv.1} parent=0 // loop_header_branch
    %12 = sbr.rel (%p10) target = $region8
  $region5: #{spdconv.1} parent=0 // loop_body
    %s14 = ssub.s32 %s9, 1
    %s15 = ssub.s32 %s9, 2
    %s22 = sadd.s32 1, %s17
    %p23 = scmp.ge.s32.totalorder %s22, 1
    %s24 = scalar_select %p23, 0, %s22
    %s25 = sadd.s32 1, %s16
    %s26 = scalar_select %p23, %s25, %s16
    %p27 = scmp.ge.s32.totalorder %s26, 2
    %s28 = scalar_select %p27, 0, %s26
    %s29 = ssub.s32 %s16, %s28
    %s30 = ssub.s32 %s17, %s24
    %s31 = sor.u32 %s29, %s30
    %p32 = scmp.eq.s32.totalorder %s31, 0
    %s34 = sadd.s32 %s33, 1
    %s35 = scalar_select %p32, %s33, %s34
    %p38 = pneg %p32
    %p39 = scmp.eq.s32.totalorder %s9, 1
    %p40 = por %p38, %p39
    %p41 = scmp.ne.s32.totalorder %s33, %s36
    %p42 = scmp.eq.s32.totalorder %s9, 0
    %p43 = por %p41, %p42
    %p44 = scmp.ne.s32.totalorder %s33, %s36
    %p45 = scmp.eq.s32.totalorder %s14, 1
    %p46 = por %p44, %p45
    %p47 = scmp.ne.s32.totalorder %s36, %s37
    %p48 = scmp.eq.s32.totalorder %s14, 0
    %p49 = por %p47, %p48
    %p50 = scmp.ne.s32.totalorder %s36, %s37
    %p51 = scmp.eq.s32.totalorder %s15, 1
    %p52 = por %p50, %p51
    %p54 = scmp.ne.s32.totalorder %s37, %s53
    %p55 = scmp.eq.s32.totalorder %s15, 0
    %p56 = por %p54, %p55
    %s58 = sadd.s32 %s57, 1
    %p61 = scmp.eq.s32.totalorder %s9, 1
    %p62 = scmp.ne.s32.totalorder %s57, %s59
    %p63 = scmp.eq.s32.totalorder %s9, 0
    %p64 = por %p62, %p63
    %p65 = scmp.ne.s32.totalorder %s57, %s59
    %p66 = scmp.eq.s32.totalorder %s14, 1
    %p67 = por %p65, %p66
    %p68 = scmp.ne.s32.totalorder %s59, %s60
    %p69 = scmp.eq.s32.totalorder %s14, 0
    %p70 = por %p68, %p69
    %p71 = scmp.ne.s32.totalorder %s59, %s60
    %p72 = scmp.eq.s32.totalorder %s15, 1
    %p73 = por %p71, %p72
    %p75 = scmp.ne.s32.totalorder %s60, %s74
    %p76 = scmp.eq.s32.totalorder %s15, 0
    %p77 = por %p75, %p76
    %s79 = sadd.s32 %s78, 1
    %p82 = scmp.eq.s32.totalorder %s9, 1
    %p83 = scmp.ne.s32.totalorder %s78, %s80
    %p84 = scmp.eq.s32.totalorder %s9, 0
    %p85 = por %p83, %p84
    %p86 = scmp.ne.s32.totalorder %s78, %s80
    %p87 = scmp.eq.s32.totalorder %s14, 1
    %p88 = por %p86, %p87
    %p89 = scmp.ne.s32.totalorder %s80, %s81
    %p90 = scmp.eq.s32.totalorder %s14, 0
    %p91 = por %p89, %p90
    %p92 = scmp.ne.s32.totalorder %s80, %s81
    %p93 = scmp.eq.s32.totalorder %s15, 1
    %p94 = por %p92, %p93
    %p96 = scmp.ne.s32.totalorder %s81, %s95
    %p97 = scmp.eq.s32.totalorder %s15, 0
    %p98 = por %p96, %p97
    %s99 = ssub.s32 %s16, %s28
    %s100 = ssub.s32 %s17, %s24
    %s101 = sor.u32 %s99, %s100
    %p102 = scmp.eq.s32.totalorder %s101, 0
    %s104 = sadd.s32 %s103, 1
    %s105 = scalar_select %p102, %s103, %s104
    %p108 = pneg %p102
    %p109 = scmp.eq.s32.totalorder %s9, 1
    %p110 = por %p108, %p109
    %p111 = scmp.ne.s32.totalorder %s103, %s106
    %p112 = scmp.eq.s32.totalorder %s9, 0
    %p113 = por %p111, %p112
    %p114 = scmp.ne.s32.totalorder %s103, %s106
    %p115 = scmp.eq.s32.totalorder %s14, 1
    %p116 = por %p114, %p115
    %p117 = scmp.ne.s32.totalorder %s106, %s107
    %p118 = scmp.eq.s32.totalorder %s14, 0
    %p119 = por %p117, %p118
    %p120 = scmp.ne.s32.totalorder %s106, %s107
    %p121 = scmp.eq.s32.totalorder %s15, 1
    %p122 = por %p120, %p121
    %p124 = scmp.ne.s32.totalorder %s107, %s123
    %p125 = scmp.eq.s32.totalorder %s15, 0
    %p126 = por %p124, %p125
    %p127 = scmp.le.s32.totalorder 1, %s9
    %p128 = scmp.lt.s32.totalorder %s9, 3
    %p129 = pnand %p127, %p128
    %p130 = pneg %p129
    // Predicated region
    $region9: #{spdconv.1} parent=5 // pred_check
      _
    $region10: #{spdconv.1} parent=5 // pred_check_branch
      %132 = sbr.rel (%p129) target = $region12
    $region11: #{spdconv.1} parent=5 // pred_region
      %s133 = ssub.s32 %s9, 1
      // Predicated region
      $region13: #{spdconv.1} parent=11 // pred_check
        %p134 = pneg %p70
      $region14: #{spdconv.1} parent=11 // pred_check_branch
        %136 = sbr.rel (%p134) target = $region16
      $region15: #{spdconv.1} parent=11 // pred_region
        _
      $region16: #{spdconv.1} parent=11 // pred_fallthru
        _
      // Predicated region
      $region17: #{spdconv.1} parent=11 // pred_check
        %p137 = pneg %p91
      $region18: #{spdconv.1} parent=11 // pred_check_branch
        %139 = sbr.rel (%p137) target = $region20
      $region19: #{spdconv.1} parent=11 // pred_region
        _
      $region20: #{spdconv.1} parent=11 // pred_fallthru
        _
    $region12: #{spdconv.1} parent=5 // pred_fallthru
      _
    %p140 = scmp.lt.s32.totalorder %s9, 2
    // Predicated region
    $region21: #{spdconv.1} parent=5 // pred_check
      %p141 = pneg %p140
    $region22: #{spdconv.1} parent=5 // pred_check_branch
      %143 = sbr.rel (%p141) target = $region24
    $region23: #{spdconv.1} parent=5 // pred_region
      // Predicated region
      $region25: #{spdconv.1} parent=23 // pred_check
        %p144 = pneg %p43
      $region26: #{spdconv.1} parent=23 // pred_check_branch
        %146 = sbr.rel (%p144) target = $region28
      $region27: #{spdconv.1} parent=23 // pred_region
        %p147 = scmp.lt.s32.totalorder %s16, 1
        %s148 = scalar_select %p147, %s16, 1
        %p149 = scmp.lt.s32.totalorder %s17, 0
        %s150 = scalar_select %p149, %s17, 0
        %s151 = smul.addr %s150, 22
        %s152 = smul.addr %s148, 22
        %s153 = sadd.s32 %s151, %s152
        %s154 = smul.addr %s153, 4
        %s155 = scalar_lea.vmem %s0, %s154
      $region28: #{spdconv.1} parent=23 // pred_fallthru
        _
    $region24: #{spdconv.1} parent=5 // pred_fallthru
      _
    %p156 = scmp.le.s32.totalorder 1, %s9
    %p157 = scmp.lt.s32.totalorder %s9, 3
    %p158 = pnand %p156, %p157
    %p159 = pneg %p158
    // Predicated region
    $region29: #{spdconv.1} parent=5 // pred_check
      _
    $region30: #{spdconv.1} parent=5 // pred_check_branch
      %161 = sbr.rel (%p158) target = $region32
    $region31: #{spdconv.1} parent=5 // pred_region
      %s162 = ssub.s32 %s9, 1
      %p163 = scmp.lt.s32.totalorder %s18, 1
      %s164 = scalar_select %p163, %s18, 1
      %p165 = scmp.lt.s32.totalorder %s19, 0
      %s166 = scalar_select %p165, %s19, 0
      %s167 = smul.addr %s166, 22
      %s168 = smul.addr %s164, 22
      %s169 = sadd.s32 %s167, %s168
      %s170 = smul.addr %s169, 4
      %s171 = scalar_lea.vmem %s0, %s170
      %p172 = pneg %p49
      %p173 = pneg %p46
      %p174 = pneg %p70
      %p175 = pneg %p67
      %p176 = pneg %p91
      %p177 = pneg %p88
      %p178 = pneg %p119
      %p179 = pneg %p116
      %s180 = smul.u32 16, %s19
      %p181 = scmp.lt.s32.totalorder %s18, 1
      %s182 = scalar_select %p181, %s18, 1
      %p183 = scmp.lt.s32.totalorder %s180, 15
      %s184 = scalar_select %p183, %s180, 15
      %s185 = smul.addr %s182, 16
      %s186 = sadd.s32 %s184, %s185
      %s187 = smul.addr %s186, 4
      %s188 = scalar_lea.vmem %s3, %s187
      %p189 = scmp.lt.s32.totalorder %s18, 1
      %s190 = scalar_select %p189, %s18, 1
      %p191 = scmp.lt.s32.totalorder %s19, 0
      %s192 = scalar_select %p191, %s19, 0
      %s193 = smul.addr %s192, 22
      %s194 = smul.addr %s190, 22
      %s195 = sadd.s32 %s193, %s194
      %s196 = smul.addr %s195, 4
      %s197 = scalar_lea.vmem %s0, %s196
      %s198 = smul.u32 16, %s19
      %p199 = scmp.lt.s32.totalorder %s18, 1
      %s200 = scalar_select %p199, %s18, 1
      %p201 = scmp.lt.s32.totalorder %s198, 15
      %s202 = scalar_select %p201, %s198, 15
      %s203 = smul.addr %s200, 16
      %s204 = sadd.s32 %s202, %s203
      %s205 = smul.addr %s204, 4
      %s206 = scalar_lea.vmem %s3, %s205
      %s207 = smul.u32 16, %s19
      %v208 = vld [vmem:[%s197] sm:$0xf]
      %v209 = vld [vmem:[%s197 + $0x4] sm:$0xf]
      %v210 = vld [vmem:[%s197 + $0x8] sm:$0xf]
      %v211 = vld [vmem:[%s197 + $0xc] sm:$0xf]
      %v212 = vld [vmem:[%s197 + $0x10] sm:$0xf]
      %v213 = vld [vmem:[%s197 + $0x14] sm:$0xf]
      %v214 = vld [vmem:[%s197 + $0x18] sm:$0xf]
      %v215 = vld [vmem:[%s197 + $0x1c] sm:$0xf]
      %v216 = vld [vmem:[%s197 + $0x20] sm:$0xf]
      %v217 = vld [vmem:[%s197 + $0x24] sm:$0xf]
      %v218 = vld [vmem:[%s197 + $0x28] sm:$0xf]
      %v219 = vld [vmem:[%s197 + $0x2c] sm:$0xf]
      %v220 = vld [vmem:[%s197 + $0x30] sm:$0xf]
      %v221 = vld [vmem:[%s197 + $0x34] sm:$0xf]
      %v222 = vld [vmem:[%s197 + $0x38] sm:$0xf]
      %v223 = vld [vmem:[%s197 + $0x3c] sm:$0xf]
      %v224 = vld [vmem:[%s197 + $0x40] sm:$0xf]
      %v225 = vld [vmem:[%s197 + $0x44] sm:$0xf]
      %v226 = vld [vmem:[%s197 + $0x48] sm:$0xf]
      %v227 = vld [vmem:[%s197 + $0x4c] sm:$0xf]
      %v228 = vld [vmem:[%s197 + $0x50] sm:$0xf]
      %v229 = vunpack.c.l.bf16 %v208
      %v230 = vunpack.c.l.bf16 %v209
      %v231 = vunpack.c.l.bf16 %v210
      %v232 = vunpack.c.l.bf16 %v211
      %v233 = vunpack.c.l.bf16 %v212
      %v234 = vunpack.c.l.bf16 %v213
      %v235 = vunpack.c.l.bf16 %v214
      %v236 = vunpack.c.l.bf16 %v215
      %v237 = vunpack.c.l.bf16 %v216
      %v238 = vunpack.c.l.bf16 %v217
      %v239 = vunpack.c.l.bf16 %v218
      %v240 = vunpack.c.l.bf16 %v219
      %v241 = vunpack.c.l.bf16 %v220
      %v242 = vunpack.c.l.bf16 %v221
      %v243 = vunpack.c.l.bf16 %v222
      %v244 = vunpack.c.l.bf16 %v223
      %v245 = vunpack.c.l.bf16 %v224
      %v246 = vunpack.c.l.bf16 %v225
      %v247 = vunpack.c.l.bf16 %v226
      %v248 = vunpack.c.l.bf16 %v227
      %v249 = vunpack.c.l.bf16 %v228
      %v250 = vpack.c.bf16 %v229, %v229
      %v251 = vpack.c.bf16 %v230, %v230
      %v252 = vpack.c.bf16 %v231, %v231
      %v253 = vpack.c.bf16 %v232, %v232
      %v254 = vpack.c.bf16 %v233, %v233
      %v255 = vpack.c.bf16 %v234, %v234
      %v256 = vpack.c.bf16 %v235, %v235
      %v257 = vpack.c.bf16 %v236, %v236
      %v258 = vpack.c.bf16 %v237, %v237
      %v259 = vpack.c.bf16 %v238, %v238
      %v260 = vpack.c.bf16 %v239, %v239
      %v261 = vpack.c.bf16 %v240, %v240
      %v262 = vpack.c.bf16 %v241, %v241
      %v263 = vpack.c.bf16 %v242, %v242
      %v264 = vpack.c.bf16 %v243, %v243
      %v265 = vpack.c.bf16 %v244, %v244
      %v266 = vpack.c.bf16 %v245, %v245
      %v267 = vpack.c.bf16 %v246, %v246
      %v268 = vpack.c.bf16 %v247, %v247
      %v269 = vpack.c.bf16 %v248, %v248
      %v270 = vpack.c.bf16 %v249, %v249
      %v291 = vunpack.c.l.b16 %v250
      %v292 = vunpack.c.l.b16 %v251
      %v293 = vunpack.c.l.b16 %v252
      %v294 = vunpack.c.l.b16 %v253
      %v295 = vunpack.c.l.b16 %v254
      %v296 = vunpack.c.l.b16 %v255
      %v297 = vunpack.c.l.b16 %v256
      %v298 = vunpack.c.l.b16 %v257
      %v299 = vunpack.c.l.b16 %v258
      %v300 = vunpack.c.l.b16 %v259
      %v301 = vunpack.c.l.b16 %v260
      %v302 = vunpack.c.l.b16 %v261
      %v303 = vunpack.c.l.b16 %v262
      %v304 = vunpack.c.l.b16 %v263
      %v305 = vunpack.c.l.b16 %v264
      %v306 = vunpack.c.l.b16 %v265
      %v307 = vunpack.c.l.b16 %v266
      %v308 = vunpack.c.l.b16 %v267
      %v309 = vunpack.c.l.b16 %v268
      %v310 = vunpack.c.l.b16 %v269
      %v311 = vpack.c.b16 %v292, %v291
      %v312 = vpack.c.b16 %v294, %v293
      %v313 = vpack.c.b16 %v296, %v295
      %v314 = vpack.c.b16 %v298, %v297
      %v315 = vpack.c.b16 %v300, %v299
      %v316 = vpack.c.b16 %v302, %v301
      %v317 = vpack.c.b16 %v304, %v303
      %v318 = vpack.c.b16 %v306, %v305
      %v319 = vpack.c.b16 %v308, %v307
      %v320 = vpack.c.b16 %v310, %v309
      %v332 = vunpack.c.l.b16 %v270
      %v333 = vpack.c.b16 %v332, %v332
      %vm334 = vsmask.f32 7424
      %v336 = vshrl.u32 %v311, 16
      %v338 = vshll.u32 %v311, 16
      %v340 = vrot.slane %v338, 1
      %v341 = vor.u32 %v336, %v340
      %v343 = vshll.u32 %v312, 16
      %v345 = vrot.slane %v343, 1
      %v346 = vsel %vm334, %v341, %v345
      %v347 = vshrl.u32 %v312, 16
      %v349 = vor.u32 %v347, %v345
      %v351 = vshll.u32 %v313, 16
      %v353 = vrot.slane %v351, 1
      %v354 = vsel %vm334, %v349, %v353
      %v355 = vshrl.u32 %v313, 16
      %v357 = vor.u32 %v355, %v353
      %v359 = vshll.u32 %v314, 16
      %v361 = vrot.slane %v359, 1
      %v362 = vsel %vm334, %v357, %v361
      %v363 = vshrl.u32 %v314, 16
      %v365 = vor.u32 %v363, %v361
      %v367 = vshll.u32 %v315, 16
      %v369 = vrot.slane %v367, 1
      %v370 = vsel %vm334, %v365, %v369
      %v371 = vshrl.u32 %v315, 16
      %v373 = vor.u32 %v371, %v369
      %v375 = vshll.u32 %v316, 16
      %v377 = vrot.slane %v375, 1
      %v378 = vsel %vm334, %v373, %v377
      %v379 = vshrl.u32 %v316, 16
      %v381 = vor.u32 %v379, %v377
      %v383 = vshll.u32 %v317, 16
      %v385 = vrot.slane %v383, 1
      %v386 = vsel %vm334, %v381, %v385
      %v387 = vshrl.u32 %v317, 16
      %v389 = vor.u32 %v387, %v385
      %v391 = vshll.u32 %v318, 16
      %v393 = vrot.slane %v391, 1
      %v394 = vsel %vm334, %v389, %v393
      %v395 = vshrl.u32 %v318, 16
      %v397 = vor.u32 %v395, %v393
      %v399 = vshll.u32 %v319, 16
      %v401 = vrot.slane %v399, 1
      %v402 = vsel %vm334, %v397, %v401
      %v403 = vshrl.u32 %v319, 16
      %v405 = vor.u32 %v403, %v401
      %v407 = vshll.u32 %v320, 16
      %v409 = vrot.slane %v407, 1
      %v410 = vsel %vm334, %v405, %v409
      %v411 = vshrl.u32 %v320, 16
      %v413 = vor.u32 %v411, %v409
      %v415 = vshll.u32 %v333, 16
      %v417 = vrot.slane %v415, 1
      %v418 = vsel %vm334, %v413, %v417
      %vm429 = vcmask 1046528
      %v430 = vrot.slane %v311, 1
      %v431 = vrot.slane %v312, 1
      %v432 = vsel %vm429, %v430, %v431
      %v433 = vrot.slane %v313, 1
      %v434 = vsel %vm429, %v431, %v433
      %v435 = vrot.slane %v314, 1
      %v436 = vsel %vm429, %v433, %v435
      %v437 = vrot.slane %v315, 1
      %v438 = vsel %vm429, %v435, %v437
      %v439 = vrot.slane %v316, 1
      %v440 = vsel %vm429, %v437, %v439
      %v441 = vrot.slane %v317, 1
      %v442 = vsel %vm429, %v439, %v441
      %v443 = vrot.slane %v318, 1
      %v444 = vsel %vm429, %v441, %v443
      %v445 = vrot.slane %v319, 1
      %v446 = vsel %vm429, %v443, %v445
      %v447 = vrot.slane %v320, 1
      %v448 = vsel %vm429, %v445, %v447
      %v449 = vrot.slane %v333, 1
      %v450 = vsel %vm429, %v447, %v449
      %v461 = vld [vmem:[%s1] sm:$0xf]
      %v462 = vld [vmem:[%s1 + $0x4] sm:$0xf]
      %v463 = vld [vmem:[%s1 + $0x8] sm:$0xf]
      %v464 = vld [vmem:[%s1 + $0xc] sm:$0xf]
      %v465 = vld [vmem:[%s1 + $0x10] sm:$0xf]
      %v466 = vld [vmem:[%s1 + $0x14] sm:$0xf]
      %v467 = vld [vmem:[%s1 + $0x18] sm:$0xf]
      %v468 = vld [vmem:[%s1 + $0x1c] sm:$0xf]
      %v469 = vld [vmem:[%s1 + $0x20] sm:$0xf]
      %v470 = vld [vmem:[%s1 + $0x24] sm:$0xf]
      %v471 = vld [vmem:[%s1 + $0x28] sm:$0xf]
      %v472 = vld [vmem:[%s1 + $0x2c] sm:$0xf]
      %v473 = vld [vmem:[%s1 + $0x30] sm:$0xf]
      %v474 = vld [vmem:[%s1 + $0x34] sm:$0xf]
      %v475 = vld [vmem:[%s1 + $0x38] sm:$0xf]
      %v476 = vld [vmem:[%s1 + $0x3c] sm:$0xf]
      %v477 = vld [vmem:[%s1 + $0x40] sm:$0xf]
      %v478 = vld [vmem:[%s1 + $0x44] sm:$0xf]
      %v479 = vld [vmem:[%s1 + $0x48] sm:$0xf]
      %v480 = vld [vmem:[%s1 + $0x4c] sm:$0xf]
      %v481 = vld [vmem:[%s1 + $0x50] sm:$0xf]
      %v482 = vld [vmem:[%s1 + $0x54] sm:$0xf]
      %v483 = vld [vmem:[%s1 + $0x58] sm:$0xf]
      %v484 = vld [vmem:[%s1 + $0x5c] sm:$0xf]
      %v485 = vld [vmem:[%s1 + $0x60] sm:$0xf]
      %v486 = vld [vmem:[%s1 + $0x64] sm:$0xf]
      %v487 = vld [vmem:[%s1 + $0x68] sm:$0xf]
      %v488 = vld [vmem:[%s1 + $0x6c] sm:$0xf]
      %v489 = vld [vmem:[%s1 + $0x70] sm:$0xf]
      %v490 = vld [vmem:[%s1 + $0x74] sm:$0xf]
      %v491 = vld [vmem:[%s1 + $0x78] sm:$0xf]
      %v492 = vld [vmem:[%s1 + $0x7c] sm:$0xf]
      %v493 = vld [vmem:[%s1 + $0x80] sm:$0xf]
      %v494 = vld [vmem:[%s1 + $0x84] sm:$0xf]
      %v495 = vld [vmem:[%s1 + $0x88] sm:$0xf]
      %v496 = vld [vmem:[%s1 + $0x8c] sm:$0xf]
      %v497 = vld [vmem:[%s1 + $0x90] sm:$0xf]
      %v498 = vld [vmem:[%s1 + $0x94] sm:$0xf]
      %v499 = vld [vmem:[%s1 + $0x98] sm:$0xf]
      %v500 = vld [vmem:[%s1 + $0x9c] sm:$0xf]
      %v501 = vld [vmem:[%s1 + $0xa0] sm:$0xf]
      %v502 = vld [vmem:[%s1 + $0xa4] sm:$0xf]
      %v503 = vld [vmem:[%s1 + $0xa8] sm:$0xf]
      %v504 = vld [vmem:[%s1 + $0xac] sm:$0xf]
      %v505 = vld [vmem:[%s1 + $0xb0] sm:$0xf]
      %v506 = vld [vmem:[%s1 + $0xb4] sm:$0xf]
      %v507 = vld [vmem:[%s1 + $0xb8] sm:$0xf]
      %v508 = vld [vmem:[%s1 + $0xbc] sm:$0xf]
      %s509 = scalar_lea.vmem %s1, 192
      %v510 = vld [vmem:[%s509] sm:$0xf]
      %v511 = vld [vmem:[%s509 + $0x4] sm:$0xf]
      %v512 = vld [vmem:[%s509 + $0x8] sm:$0xf]
      %v513 = vld [vmem:[%s509 + $0xc] sm:$0xf]
      %v514 = vld [vmem:[%s509 + $0x10] sm:$0xf]
      %v515 = vld [vmem:[%s509 + $0x14] sm:$0xf]
      %v516 = vld [vmem:[%s509 + $0x18] sm:$0xf]
      %v517 = vld [vmem:[%s509 + $0x1c] sm:$0xf]
      %v518 = vld [vmem:[%s509 + $0x20] sm:$0xf]
      %v519 = vld [vmem:[%s509 + $0x24] sm:$0xf]
      %v520 = vld [vmem:[%s509 + $0x28] sm:$0xf]
      %v521 = vld [vmem:[%s509 + $0x2c] sm:$0xf]
      %v522 = vld [vmem:[%s509 + $0x30] sm:$0xf]
      %v523 = vld [vmem:[%s509 + $0x34] sm:$0xf]
      %v524 = vld [vmem:[%s509 + $0x38] sm:$0xf]
      %v525 = vld [vmem:[%s509 + $0x3c] sm:$0xf]
      %v526 = vld [vmem:[%s509 + $0x40] sm:$0xf]
      %v527 = vld [vmem:[%s509 + $0x44] sm:$0xf]
      %v528 = vld [vmem:[%s509 + $0x48] sm:$0xf]
      %v529 = vld [vmem:[%s509 + $0x4c] sm:$0xf]
      %v530 = vld [vmem:[%s509 + $0x50] sm:$0xf]
      %v531 = vld [vmem:[%s509 + $0x54] sm:$0xf]
      %v532 = vld [vmem:[%s509 + $0x58] sm:$0xf]
      %v533 = vld [vmem:[%s509 + $0x5c] sm:$0xf]
      %v534 = vld [vmem:[%s509 + $0x60] sm:$0xf]
      %v535 = vld [vmem:[%s509 + $0x64] sm:$0xf]
      %v536 = vld [vmem:[%s509 + $0x68] sm:$0xf]
      %v537 = vld [vmem:[%s509 + $0x6c] sm:$0xf]
      %v538 = vld [vmem:[%s509 + $0x70] sm:$0xf]
      %v539 = vld [vmem:[%s509 + $0x74] sm:$0xf]
      %v540 = vld [vmem:[%s509 + $0x78] sm:$0xf]
      %v541 = vld [vmem:[%s509 + $0x7c] sm:$0xf]
      %v542 = vld [vmem:[%s509 + $0x80] sm:$0xf]
      %v543 = vld [vmem:[%s509 + $0x84] sm:$0xf]
      %v544 = vld [vmem:[%s509 + $0x88] sm:$0xf]
      %v545 = vld [vmem:[%s509 + $0x8c] sm:$0xf]
      %v546 = vld [vmem:[%s509 + $0x90] sm:$0xf]
      %v547 = vld [vmem:[%s509 + $0x94] sm:$0xf]
      %v548 = vld [vmem:[%s509 + $0x98] sm:$0xf]
      %v549 = vld [vmem:[%s509 + $0x9c] sm:$0xf]
      %v550 = vld [vmem:[%s509 + $0xa0] sm:$0xf]
      %v551 = vld [vmem:[%s509 + $0xa4] sm:$0xf]
      %v552 = vld [vmem:[%s509 + $0xa8] sm:$0xf]
      %v553 = vld [vmem:[%s509 + $0xac] sm:$0xf]
      %v554 = vld [vmem:[%s509 + $0xb0] sm:$0xf]
      %v555 = vld [vmem:[%s509 + $0xb4] sm:$0xf]
      %v556 = vld [vmem:[%s509 + $0xb8] sm:$0xf]
      %v557 = vld [vmem:[%s509 + $0xbc] sm:$0xf]
      %v606 = vunpack.c.l.b16 %v510
      %v607 = vunpack.c.l.b16 %v511
      %v608 = vunpack.c.l.b16 %v512
      %v609 = vunpack.c.l.b16 %v513
      %v610 = vunpack.c.l.b16 %v514
      %v611 = vunpack.c.l.b16 %v515
      %v612 = vunpack.c.l.b16 %v516
      %v613 = vunpack.c.l.b16 %v517
      %v614 = vunpack.c.l.b16 %v518
      %v615 = vunpack.c.l.b16 %v519
      %v616 = vunpack.c.l.b16 %v520
      %v617 = vunpack.c.l.b16 %v521
      %v618 = vunpack.c.l.b16 %v522
      %v619 = vunpack.c.l.b16 %v523
      %v620 = vunpack.c.l.b16 %v524
      %v621 = vunpack.c.l.b16 %v525
      %v622 = vunpack.c.l.b16 %v526
      %v623 = vunpack.c.l.b16 %v527
      %v624 = vunpack.c.l.b16 %v528
      %v625 = vunpack.c.l.b16 %v529
      %v626 = vunpack.c.l.b16 %v530
      %v627 = vunpack.c.l.b16 %v531
      %v628 = vunpack.c.l.b16 %v532
      %v629 = vunpack.c.l.b16 %v533
      %v630 = vunpack.c.l.b16 %v534
      %v631 = vunpack.c.l.b16 %v535
      %v632 = vunpack.c.l.b16 %v536
      %v633 = vunpack.c.l.b16 %v537
      %v634 = vunpack.c.l.b16 %v538
      %v635 = vunpack.c.l.b16 %v539
      %v636 = vunpack.c.l.b16 %v540
      %v637 = vunpack.c.l.b16 %v541
      %v638 = vunpack.c.l.b16 %v542
      %v639 = vunpack.c.l.b16 %v543
      %v640 = vunpack.c.l.b16 %v544
      %v641 = vunpack.c.l.b16 %v545
      %v642 = vunpack.c.l.b16 %v546
      %v643 = vunpack.c.l.b16 %v547
      %v644 = vunpack.c.l.b16 %v548
      %v645 = vunpack.c.l.b16 %v549
      %v646 = vunpack.c.l.b16 %v550
      %v647 = vunpack.c.l.b16 %v551
      %v648 = vunpack.c.l.b16 %v552
      %v649 = vunpack.c.l.b16 %v553
      %v650 = vunpack.c.l.b16 %v554
      %v651 = vunpack.c.l.b16 %v555
      %v652 = vunpack.c.l.b16 %v556
      %v653 = vunpack.c.l.b16 %v557
      %v654 = vpack.c.b16 %v607, %v606
      %v655 = vpack.c.b16 %v609, %v608
      %v656 = vpack.c.b16 %v611, %v610
      %v657 = vpack.c.b16 %v613, %v612
      %v658 = vpack.c.b16 %v615, %v614
      %v659 = vpack.c.b16 %v617, %v616
      %v660 = vpack.c.b16 %v619, %v618
      %v661 = vpack.c.b16 %v621, %v620
      %v662 = vpack.c.b16 %v623, %v622
      %v663 = vpack.c.b16 %v625, %v624
      %v664 = vpack.c.b16 %v627, %v626
      %v665 = vpack.c.b16 %v629, %v628
      %v666 = vpack.c.b16 %v631, %v630
      %v667 = vpack.c.b16 %v633, %v632
      %v668 = vpack.c.b16 %v635, %v634
      %v669 = vpack.c.b16 %v637, %v636
      %v670 = vpack.c.b16 %v639, %v638
      %v671 = vpack.c.b16 %v641, %v640
      %v672 = vpack.c.b16 %v643, %v642
      %v673 = vpack.c.b16 %v645, %v644
      %v674 = vpack.c.b16 %v647, %v646
      %v675 = vpack.c.b16 %v649, %v648
      %v676 = vpack.c.b16 %v651, %v650
      %v677 = vpack.c.b16 %v653, %v652
      %702 = vmatpush.bf16.msra.mxu0 %v661
      %703 = vmatpush.bf16.msra.mxu0 %v660
      %704 = vmatpush.bf16.msra.mxu0 %v659
      %705 = vmatpush.bf16.msra.mxu0 %v658
      %706 = vmatpush.bf16.msra.mxu0 %v657
      %707 = vmatpush.bf16.msra.mxu0 %v656
      %708 = vmatpush.bf16.msra.mxu0 %v655
      %709 = vmatpush.bf16.msra.mxu0 %v654
      %710 = vmatmul.bf16.gmra.mxu0 %v312
      %v711 = vpop.f32.mrf.mxu0
      %v712 = vadd.f32 0.0, %v711
      %v713 = vpop.f32.mrf.mxu0
      %v714 = vadd.f32 0.0, %v713
      %715 = vmatmul.bf16.gmra.mxu0 %v313
      %v716 = vpop.f32.mrf.mxu0
      %v717 = vadd.f32 0.0, %v716
      %v718 = vpop.f32.mrf.mxu0
      %v719 = vadd.f32 0.0, %v718
      %720 = vmatmul.bf16.gmra.mxu0 %v314
      %v721 = vpop.f32.mrf.mxu0
      %v722 = vadd.f32 0.0, %v721
      %v723 = vpop.f32.mrf.mxu0
      %v724 = vadd.f32 0.0, %v723
      %725 = vmatmul.bf16.gmra.mxu0 %v315
      %v726 = vpop.f32.mrf.mxu0
      %v727 = vadd.f32 0.0, %v726
      %v728 = vpop.f32.mrf.mxu0
      %v729 = vadd.f32 0.0, %v728
      %730 = vmatmul.bf16.gmra.mxu0 %v316
      %v731 = vpop.f32.mrf.mxu0
      %v732 = vadd.f32 0.0, %v731
      %v733 = vpop.f32.mrf.mxu0
      %v734 = vadd.f32 0.0, %v733
      %735 = vmatmul.bf16.gmra.mxu0 %v317
      %v736 = vpop.f32.mrf.mxu0
      %v737 = vadd.f32 0.0, %v736
      %v738 = vpop.f32.mrf.mxu0
      %v739 = vadd.f32 0.0, %v738
      %740 = vmatmul.bf16.gmra.mxu0 %v318
      %v741 = vpop.f32.mrf.mxu0
      %v742 = vadd.f32 0.0, %v741
      %v743 = vpop.f32.mrf.mxu0
      %v744 = vadd.f32 0.0, %v743
      %745 = vmatmul.bf16.gmra.mxu0 %v319
      %v746 = vpop.f32.mrf.mxu0
      %v747 = vadd.f32 0.0, %v746
      %v748 = vpop.f32.mrf.mxu0
      %v749 = vadd.f32 0.0, %v748
      %750 = vdwg.mxu0
      %751 = vmatpush.bf16.msra.mxu0 %v669
      %752 = vmatpush.bf16.msra.mxu0 %v668
      %753 = vmatpush.bf16.msra.mxu0 %v667
      %754 = vmatpush.bf16.msra.mxu0 %v666
      %755 = vmatpush.bf16.msra.mxu0 %v665
      %756 = vmatpush.bf16.msra.mxu0 %v664
      %757 = vmatpush.bf16.msra.mxu0 %v663
      %758 = vmatpush.bf16.msra.mxu0 %v662
      %759 = vmatmul.bf16.gmra.mxu0 %v354
      %v760 = vpop.f32.mrf.mxu0
      %v761 = vadd.f32 %v712, %v760
      %v762 = vpop.f32.mrf.mxu0
      %v763 = vadd.f32 %v714, %v762
      %764 = vmatmul.bf16.gmra.mxu0 %v362
      %v765 = vpop.f32.mrf.mxu0
      %v766 = vadd.f32 %v717, %v765
      %v767 = vpop.f32.mrf.mxu0
      %v768 = vadd.f32 %v719, %v767
      %769 = vmatmul.bf16.gmra.mxu0 %v370
      %v770 = vpop.f32.mrf.mxu0
      %v771 = vadd.f32 %v722, %v770
      %v772 = vpop.f32.mrf.mxu0
      %v773 = vadd.f32 %v724, %v772
      %774 = vmatmul.bf16.gmra.mxu0 %v378
      %v775 = vpop.f32.mrf.mxu0
      %v776 = vadd.f32 %v727, %v775
      %v777 = vpop.f32.mrf.mxu0
      %v778 = vadd.f32 %v729, %v777
      %779 = vmatmul.bf16.gmra.mxu0 %v386
      %v780 = vpop.f32.mrf.mxu0
      %v781 = vadd.f32 %v732, %v780
      %v782 = vpop.f32.mrf.mxu0
      %v783 = vadd.f32 %v734, %v782
      %784 = vmatmul.bf16.gmra.mxu0 %v394
      %v785 = vpop.f32.mrf.mxu0
      %v786 = vadd.f32 %v737, %v785
      %v787 = vpop.f32.mrf.mxu0
      %v788 = vadd.f32 %v739, %v787
      %789 = vmatmul.bf16.gmra.mxu0 %v402
      %v790 = vpop.f32.mrf.mxu0
      %v791 = vadd.f32 %v742, %v790
      %v792 = vpop.f32.mrf.mxu0
      %v793 = vadd.f32 %v744, %v792
      %794 = vmatmul.bf16.gmra.mxu0 %v410
      %v795 = vpop.f32.mrf.mxu0
      %v796 = vadd.f32 %v747, %v795
      %v797 = vpop.f32.mrf.mxu0
      %v798 = vadd.f32 %v749, %v797
      %799 = vdwg.mxu0
      %800 = vmatpush.bf16.msra.mxu0 %v677
      %801 = vmatpush.bf16.msra.mxu0 %v676
      %802 = vmatpush.bf16.msra.mxu0 %v675
      %803 = vmatpush.bf16.msra.mxu0 %v674
      %804 = vmatpush.bf16.msra.mxu0 %v673
      %805 = vmatpush.bf16.msra.mxu0 %v672
      %806 = vmatpush.bf16.msra.mxu0 %v671
      %807 = vmatpush.bf16.msra.mxu0 %v670
      %808 = vmatmul.bf16.gmra.mxu0 %v434
      %v809 = vpop.f32.mrf.mxu0
      %v810 = vadd.f32 %v761, %v809
      %v811 = vpop.f32.mrf.mxu0
      %v812 = vadd.f32 %v763, %v811
      %813 = vmatmul.bf16.gmra.mxu0 %v436
      %v814 = vpop.f32.mrf.mxu0
      %v815 = vadd.f32 %v766, %v814
      %v816 = vpop.f32.mrf.mxu0
      %v817 = vadd.f32 %v768, %v816
      %818 = vmatmul.bf16.gmra.mxu0 %v438
      %v819 = vpop.f32.mrf.mxu0
      %v820 = vadd.f32 %v771, %v819
      %v821 = vpop.f32.mrf.mxu0
      %v822 = vadd.f32 %v773, %v821
      %823 = vmatmul.bf16.gmra.mxu0 %v440
      %v824 = vpop.f32.mrf.mxu0
      %v825 = vadd.f32 %v776, %v824
      %v826 = vpop.f32.mrf.mxu0
      %v827 = vadd.f32 %v778, %v826
      %828 = vmatmul.bf16.gmra.mxu0 %v442
      %v829 = vpop.f32.mrf.mxu0
      %v830 = vadd.f32 %v781, %v829
      %v831 = vpop.f32.mrf.mxu0
      %v832 = vadd.f32 %v783, %v831
      %833 = vmatmul.bf16.gmra.mxu0 %v444
      %v834 = vpop.f32.mrf.mxu0
      %v835 = vadd.f32 %v786, %v834
      %v836 = vpop.f32.mrf.mxu0
      %v837 = vadd.f32 %v788, %v836
      %838 = vmatmul.bf16.gmra.mxu0 %v446
      %v839 = vpop.f32.mrf.mxu0
      %v840 = vadd.f32 %v791, %v839
      %v841 = vpop.f32.mrf.mxu0
      %v842 = vadd.f32 %v793, %v841
      %843 = vmatmul.bf16.gmra.mxu0 %v448
      %v844 = vpop.f32.mrf.mxu0
      %v845 = vadd.f32 %v796, %v844
      %v846 = vpop.f32.mrf.mxu0
      %v847 = vadd.f32 %v798, %v846
      %848 = vdwg.mxu0
      %v897 = vunpack.c.l.b16 %v461
      %v898 = vunpack.c.l.b16 %v462
      %v899 = vunpack.c.l.b16 %v463
      %v900 = vunpack.c.l.b16 %v464
      %v901 = vunpack.c.l.b16 %v465
      %v902 = vunpack.c.l.b16 %v466
      %v903 = vunpack.c.l.b16 %v467
      %v904 = vunpack.c.l.b16 %v468
      %v905 = vunpack.c.l.b16 %v469
      %v906 = vunpack.c.l.b16 %v470
      %v907 = vunpack.c.l.b16 %v471
      %v908 = vunpack.c.l.b16 %v472
      %v909 = vunpack.c.l.b16 %v473
      %v910 = vunpack.c.l.b16 %v474
      %v911 = vunpack.c.l.b16 %v475
      %v912 = vunpack.c.l.b16 %v476
      %v913 = vunpack.c.l.b16 %v477
      %v914 = vunpack.c.l.b16 %v478
      %v915 = vunpack.c.l.b16 %v479
      %v916 = vunpack.c.l.b16 %v480
      %v917 = vunpack.c.l.b16 %v481
      %v918 = vunpack.c.l.b16 %v482
      %v919 = vunpack.c.l.b16 %v483
      %v920 = vunpack.c.l.b16 %v484
      %v921 = vunpack.c.l.b16 %v485
      %v922 = vunpack.c.l.b16 %v486
      %v923 = vunpack.c.l.b16 %v487
      %v924 = vunpack.c.l.b16 %v488
      %v925 = vunpack.c.l.b16 %v489
      %v926 = vunpack.c.l.b16 %v490
      %v927 = vunpack.c.l.b16 %v491
      %v928 = vunpack.c.l.b16 %v492
      %v929 = vunpack.c.l.b16 %v493
      %v930 = vunpack.c.l.b16 %v494
      %v931 = vunpack.c.l.b16 %v495
      %v932 = vunpack.c.l.b16 %v496
      %v933 = vunpack.c.l.b16 %v497
      %v934 = vunpack.c.l.b16 %v498
      %v935 = vunpack.c.l.b16 %v499
      %v936 = vunpack.c.l.b16 %v500
      %v937 = vunpack.c.l.b16 %v501
      %v938 = vunpack.c.l.b16 %v502
      %v939 = vunpack.c.l.b16 %v503
      %v940 = vunpack.c.l.b16 %v504
      %v941 = vunpack.c.l.b16 %v505
      %v942 = vunpack.c.l.b16 %v506
      %v943 = vunpack.c.l.b16 %v507
      %v944 = vunpack.c.l.b16 %v508
      %v945 = vpack.c.b16 %v898, %v897
      %v946 = vpack.c.b16 %v900, %v899
      %v947 = vpack.c.b16 %v902, %v901
      %v948 = vpack.c.b16 %v904, %v903
      %v949 = vpack.c.b16 %v906, %v905
      %v950 = vpack.c.b16 %v908, %v907
      %v951 = vpack.c.b16 %v910, %v909
      %v952 = vpack.c.b16 %v912, %v911
      %v953 = vpack.c.b16 %v914, %v913
      %v954 = vpack.c.b16 %v916, %v915
      %v955 = vpack.c.b16 %v918, %v917
      %v956 = vpack.c.b16 %v920, %v919
      %v957 = vpack.c.b16 %v922, %v921
      %v958 = vpack.c.b16 %v924, %v923
      %v959 = vpack.c.b16 %v926, %v925
      %v960 = vpack.c.b16 %v928, %v927
      %v961 = vpack.c.b16 %v930, %v929
      %v962 = vpack.c.b16 %v932, %v931
      %v963 = vpack.c.b16 %v934, %v933
      %v964 = vpack.c.b16 %v936, %v935
      %v965 = vpack.c.b16 %v938, %v937
      %v966 = vpack.c.b16 %v940, %v939
      %v967 = vpack.c.b16 %v942, %v941
      %v968 = vpack.c.b16 %v944, %v943
      %993 = vmatpush.bf16.msra.mxu0 %v952
      %994 = vmatpush.bf16.msra.mxu0 %v951
      %995 = vmatpush.bf16.msra.mxu0 %v950
      %996 = vmatpush.bf16.msra.mxu0 %v949
      %997 = vmatpush.bf16.msra.mxu0 %v948
      %998 = vmatpush.bf16.msra.mxu0 %v947
      %999 = vmatpush.bf16.msra.mxu0 %v946
      %1000 = vmatpush.bf16.msra.mxu0 %v945
      %1001 = vmatmul.bf16.gmra.mxu0 %v311
      %v1002 = vpop.f32.mrf.mxu0
      %v1003 = vadd.f32 %v810, %v1002
      %v1004 = vpop.f32.mrf.mxu0
      %v1005 = vadd.f32 %v812, %v1004
      %1006 = vmatmul.bf16.gmra.mxu0 %v312
      %v1007 = vpop.f32.mrf.mxu0
      %v1008 = vadd.f32 %v815, %v1007
      %v1009 = vpop.f32.mrf.mxu0
      %v1010 = vadd.f32 %v817, %v1009
      %1011 = vmatmul.bf16.gmra.mxu0 %v313
      %v1012 = vpop.f32.mrf.mxu0
      %v1013 = vadd.f32 %v820, %v1012
      %v1014 = vpop.f32.mrf.mxu0
      %v1015 = vadd.f32 %v822, %v1014
      %1016 = vmatmul.bf16.gmra.mxu0 %v314
      %v1017 = vpop.f32.mrf.mxu0
      %v1018 = vadd.f32 %v825, %v1017
      %v1019 = vpop.f32.mrf.mxu0
      %v1020 = vadd.f32 %v827, %v1019
      %1021 = vmatmul.bf16.gmra.mxu0 %v315
      %v1022 = vpop.f32.mrf.mxu0
      %v1023 = vadd.f32 %v830, %v1022
      %v1024 = vpop.f32.mrf.mxu0
      %v1025 = vadd.f32 %v832, %v1024
      %1026 = vmatmul.bf16.gmra.mxu0 %v316
      %v1027 = vpop.f32.mrf.mxu0
      %v1028 = vadd.f32 %v835, %v1027
      %v1029 = vpop.f32.mrf.mxu0
      %v1030 = vadd.f32 %v837, %v1029
      %1031 = vmatmul.bf16.gmra.mxu0 %v317
      %v1032 = vpop.f32.mrf.mxu0
      %v1033 = vadd.f32 %v840, %v1032
      %v1034 = vpop.f32.mrf.mxu0
      %v1035 = vadd.f32 %v842, %v1034
      %1036 = vmatmul.bf16.gmra.mxu0 %v318
      %v1037 = vpop.f32.mrf.mxu0
      %v1038 = vadd.f32 %v845, %v1037
      %v1039 = vpop.f32.mrf.mxu0
      %v1040 = vadd.f32 %v847, %v1039
      %1041 = vdwg.mxu0
      %1042 = vmatpush.bf16.msra.mxu0 %v960
      %1043 = vmatpush.bf16.msra.mxu0 %v959
      %1044 = vmatpush.bf16.msra.mxu0 %v958
      %1045 = vmatpush.bf16.msra.mxu0 %v957
      %1046 = vmatpush.bf16.msra.mxu0 %v956
      %1047 = vmatpush.bf16.msra.mxu0 %v955
      %1048 = vmatpush.bf16.msra.mxu0 %v954
      %1049 = vmatpush.bf16.msra.mxu0 %v953
      %1050 = vmatmul.bf16.gmra.mxu0 %v346
      %v1051 = vpop.f32.mrf.mxu0
      %v1052 = vadd.f32 %v1003, %v1051
      %v1053 = vpop.f32.mrf.mxu0
      %v1054 = vadd.f32 %v1005, %v1053
      %1055 = vmatmul.bf16.gmra.mxu0 %v354
      %v1056 = vpop.f32.mrf.mxu0
      %v1057 = vadd.f32 %v1008, %v1056
      %v1058 = vpop.f32.mrf.mxu0
      %v1059 = vadd.f32 %v1010, %v1058
      %1060 = vmatmul.bf16.gmra.mxu0 %v362
      %v1061 = vpop.f32.mrf.mxu0
      %v1062 = vadd.f32 %v1013, %v1061
      %v1063 = vpop.f32.mrf.mxu0
      %v1064 = vadd.f32 %v1015, %v1063
      %1065 = vmatmul.bf16.gmra.mxu0 %v370
      %v1066 = vpop.f32.mrf.mxu0
      %v1067 = vadd.f32 %v1018, %v1066
      %v1068 = vpop.f32.mrf.mxu0
      %v1069 = vadd.f32 %v1020, %v1068
      %1070 = vmatmul.bf16.gmra.mxu0 %v378
      %v1071 = vpop.f32.mrf.mxu0
      %v1072 = vadd.f32 %v1023, %v1071
      %v1073 = vpop.f32.mrf.mxu0
      %v1074 = vadd.f32 %v1025, %v1073
      %1075 = vmatmul.bf16.gmra.mxu0 %v386
      %v1076 = vpop.f32.mrf.mxu0
      %v1077 = vadd.f32 %v1028, %v1076
      %v1078 = vpop.f32.mrf.mxu0
      %v1079 = vadd.f32 %v1030, %v1078
      %1080 = vmatmul.bf16.gmra.mxu0 %v394
      %v1081 = vpop.f32.mrf.mxu0
      %v1082 = vadd.f32 %v1033, %v1081
      %v1083 = vpop.f32.mrf.mxu0
      %v1084 = vadd.f32 %v1035, %v1083
      %1085 = vmatmul.bf16.gmra.mxu0 %v402
      %v1086 = vpop.f32.mrf.mxu0
      %v1087 = vadd.f32 %v1038, %v1086
      %v1088 = vpop.f32.mrf.mxu0
      %v1089 = vadd.f32 %v1040, %v1088
      %1090 = vdwg.mxu0
      %1091 = vmatpush.bf16.msra.mxu0 %v968
      %1092 = vmatpush.bf16.msra.mxu0 %v967
      %1093 = vmatpush.bf16.msra.mxu0 %v966
      %1094 = vmatpush.bf16.msra.mxu0 %v965
      %1095 = vmatpush.bf16.msra.mxu0 %v964
      %1096 = vmatpush.bf16.msra.mxu0 %v963
      %1097 = vmatpush.bf16.msra.mxu0 %v962
      %1098 = vmatpush.bf16.msra.mxu0 %v961
      %1099 = vmatmul.bf16.gmra.mxu0 %v432
      %v1100 = vpop.f32.mrf.mxu0
      %v1101 = vadd.f32 %v1052, %v1100
      %v1102 = vpop.f32.mrf.mxu0
      %v1103 = vadd.f32 %v1054, %v1102
      %1104 = vmatmul.bf16.gmra.mxu0 %v434
      %v1105 = vpop.f32.mrf.mxu0
      %v1106 = vadd.f32 %v1057, %v1105
      %v1107 = vpop.f32.mrf.mxu0
      %v1108 = vadd.f32 %v1059, %v1107
      %1109 = vmatmul.bf16.gmra.mxu0 %v436
      %v1110 = vpop.f32.mrf.mxu0
      %v1111 = vadd.f32 %v1062, %v1110
      %v1112 = vpop.f32.mrf.mxu0
      %v1113 = vadd.f32 %v1064, %v1112
      %1114 = vmatmul.bf16.gmra.mxu0 %v438
      %v1115 = vpop.f32.mrf.mxu0
      %v1116 = vadd.f32 %v1067, %v1115
      %v1117 = vpop.f32.mrf.mxu0
      %v1118 = vadd.f32 %v1069, %v1117
      %1119 = vmatmul.bf16.gmra.mxu0 %v440
      %v1120 = vpop.f32.mrf.mxu0
      %v1121 = vadd.f32 %v1072, %v1120
      %v1122 = vpop.f32.mrf.mxu0
      %v1123 = vadd.f32 %v1074, %v1122
      %1124 = vmatmul.bf16.gmra.mxu0 %v442
      %v1125 = vpop.f32.mrf.mxu0
      %v1126 = vadd.f32 %v1077, %v1125
      %v1127 = vpop.f32.mrf.mxu0
      %v1128 = vadd.f32 %v1079, %v1127
      %1129 = vmatmul.bf16.gmra.mxu0 %v444
      %v1130 = vpop.f32.mrf.mxu0
      %v1131 = vadd.f32 %v1082, %v1130
      %v1132 = vpop.f32.mrf.mxu0
      %v1133 = vadd.f32 %v1084, %v1132
      %1134 = vmatmul.bf16.gmra.mxu0 %v446
      %v1135 = vpop.f32.mrf.mxu0
      %v1136 = vadd.f32 %v1087, %v1135
      %v1137 = vpop.f32.mrf.mxu0
      %v1138 = vadd.f32 %v1089, %v1137
      %1139 = vdwg.mxu0
      %s1140 = scalar_lea.vmem %s1, 384
      %v1141 = vld [vmem:[%s1140] sm:$0xf]
      %v1142 = vld [vmem:[%s1140 + $0x4] sm:$0xf]
      %v1143 = vld [vmem:[%s1140 + $0x8] sm:$0xf]
      %v1144 = vld [vmem:[%s1140 + $0xc] sm:$0xf]
      %v1145 = vld [vmem:[%s1140 + $0x10] sm:$0xf]
      %v1146 = vld [vmem:[%s1140 + $0x14] sm:$0xf]
      %v1147 = vld [vmem:[%s1140 + $0x18] sm:$0xf]
      %v1148 = vld [vmem:[%s1140 + $0x1c] sm:$0xf]
      %v1149 = vld [vmem:[%s1140 + $0x20] sm:$0xf]
      %v1150 = vld [vmem:[%s1140 + $0x24] sm:$0xf]
      %v1151 = vld [vmem:[%s1140 + $0x28] sm:$0xf]
      %v1152 = vld [vmem:[%s1140 + $0x2c] sm:$0xf]
      %v1153 = vld [vmem:[%s1140 + $0x30] sm:$0xf]
      %v1154 = vld [vmem:[%s1140 + $0x34] sm:$0xf]
      %v1155 = vld [vmem:[%s1140 + $0x38] sm:$0xf]
      %v1156 = vld [vmem:[%s1140 + $0x3c] sm:$0xf]
      %v1157 = vld [vmem:[%s1140 + $0x40] sm:$0xf]
      %v1158 = vld [vmem:[%s1140 + $0x44] sm:$0xf]
      %v1159 = vld [vmem:[%s1140 + $0x48] sm:$0xf]
      %v1160 = vld [vmem:[%s1140 + $0x4c] sm:$0xf]
      %v1161 = vld [vmem:[%s1140 + $0x50] sm:$0xf]
      %v1162 = vld [vmem:[%s1140 + $0x54] sm:$0xf]
      %v1163 = vld [vmem:[%s1140 + $0x58] sm:$0xf]
      %v1164 = vld [vmem:[%s1140 + $0x5c] sm:$0xf]
      %v1165 = vld [vmem:[%s1140 + $0x60] sm:$0xf]
      %v1166 = vld [vmem:[%s1140 + $0x64] sm:$0xf]
      %v1167 = vld [vmem:[%s1140 + $0x68] sm:$0xf]
      %v1168 = vld [vmem:[%s1140 + $0x6c] sm:$0xf]
      %v1169 = vld [vmem:[%s1140 + $0x70] sm:$0xf]
      %v1170 = vld [vmem:[%s1140 + $0x74] sm:$0xf]
      %v1171 = vld [vmem:[%s1140 + $0x78] sm:$0xf]
      %v1172 = vld [vmem:[%s1140 + $0x7c] sm:$0xf]
      %v1173 = vld [vmem:[%s1140 + $0x80] sm:$0xf]
      %v1174 = vld [vmem:[%s1140 + $0x84] sm:$0xf]
      %v1175 = vld [vmem:[%s1140 + $0x88] sm:$0xf]
      %v1176 = vld [vmem:[%s1140 + $0x8c] sm:$0xf]
      %v1177 = vld [vmem:[%s1140 + $0x90] sm:$0xf]
      %v1178 = vld [vmem:[%s1140 + $0x94] sm:$0xf]
      %v1179 = vld [vmem:[%s1140 + $0x98] sm:$0xf]
      %v1180 = vld [vmem:[%s1140 + $0x9c] sm:$0xf]
      %v1181 = vld [vmem:[%s1140 + $0xa0] sm:$0xf]
      %v1182 = vld [vmem:[%s1140 + $0xa4] sm:$0xf]
      %v1183 = vld [vmem:[%s1140 + $0xa8] sm:$0xf]
      %v1184 = vld [vmem:[%s1140 + $0xac] sm:$0xf]
      %v1185 = vld [vmem:[%s1140 + $0xb0] sm:$0xf]
      %v1186 = vld [vmem:[%s1140 + $0xb4] sm:$0xf]
      %v1187 = vld [vmem:[%s1140 + $0xb8] sm:$0xf]
      %v1188 = vld [vmem:[%s1140 + $0xbc] sm:$0xf]
      %v1237 = vunpack.c.l.b16 %v1141
      %v1238 = vunpack.c.l.b16 %v1142
      %v1239 = vunpack.c.l.b16 %v1143
      %v1240 = vunpack.c.l.b16 %v1144
      %v1241 = vunpack.c.l.b16 %v1145
      %v1242 = vunpack.c.l.b16 %v1146
      %v1243 = vunpack.c.l.b16 %v1147
      %v1244 = vunpack.c.l.b16 %v1148
      %v1245 = vunpack.c.l.b16 %v1149
      %v1246 = vunpack.c.l.b16 %v1150
      %v1247 = vunpack.c.l.b16 %v1151
      %v1248 = vunpack.c.l.b16 %v1152
      %v1249 = vunpack.c.l.b16 %v1153
      %v1250 = vunpack.c.l.b16 %v1154
      %v1251 = vunpack.c.l.b16 %v1155
      %v1252 = vunpack.c.l.b16 %v1156
      %v1253 = vunpack.c.l.b16 %v1157
      %v1254 = vunpack.c.l.b16 %v1158
      %v1255 = vunpack.c.l.b16 %v1159
      %v1256 = vunpack.c.l.b16 %v1160
      %v1257 = vunpack.c.l.b16 %v1161
      %v1258 = vunpack.c.l.b16 %v1162
      %v1259 = vunpack.c.l.b16 %v1163
      %v1260 = vunpack.c.l.b16 %v1164
      %v1261 = vunpack.c.l.b16 %v1165
      %v1262 = vunpack.c.l.b16 %v1166
      %v1263 = vunpack.c.l.b16 %v1167
      %v1264 = vunpack.c.l.b16 %v1168
      %v1265 = vunpack.c.l.b16 %v1169
      %v1266 = vunpack.c.l.b16 %v1170
      %v1267 = vunpack.c.l.b16 %v1171
      %v1268 = vunpack.c.l.b16 %v1172
      %v1269 = vunpack.c.l.b16 %v1173
      %v1270 = vunpack.c.l.b16 %v1174
      %v1271 = vunpack.c.l.b16 %v1175
      %v1272 = vunpack.c.l.b16 %v1176
      %v1273 = vunpack.c.l.b16 %v1177
      %v1274 = vunpack.c.l.b16 %v1178
      %v1275 = vunpack.c.l.b16 %v1179
      %v1276 = vunpack.c.l.b16 %v1180
      %v1277 = vunpack.c.l.b16 %v1181
      %v1278 = vunpack.c.l.b16 %v1182
      %v1279 = vunpack.c.l.b16 %v1183
      %v1280 = vunpack.c.l.b16 %v1184
      %v1281 = vunpack.c.l.b16 %v1185
      %v1282 = vunpack.c.l.b16 %v1186
      %v1283 = vunpack.c.l.b16 %v1187
      %v1284 = vunpack.c.l.b16 %v1188
      %v1285 = vpack.c.b16 %v1238, %v1237
      %v1286 = vpack.c.b16 %v1240, %v1239
      %v1287 = vpack.c.b16 %v1242, %v1241
      %v1288 = vpack.c.b16 %v1244, %v1243
      %v1289 = vpack.c.b16 %v1246, %v1245
      %v1290 = vpack.c.b16 %v1248, %v1247
      %v1291 = vpack.c.b16 %v1250, %v1249
      %v1292 = vpack.c.b16 %v1252, %v1251
      %v1293 = vpack.c.b16 %v1254, %v1253
      %v1294 = vpack.c.b16 %v1256, %v1255
      %v1295 = vpack.c.b16 %v1258, %v1257
      %v1296 = vpack.c.b16 %v1260, %v1259
      %v1297 = vpack.c.b16 %v1262, %v1261
      %v1298 = vpack.c.b16 %v1264, %v1263
      %v1299 = vpack.c.b16 %v1266, %v1265
      %v1300 = vpack.c.b16 %v1268, %v1267
      %v1301 = vpack.c.b16 %v1270, %v1269
      %v1302 = vpack.c.b16 %v1272, %v1271
      %v1303 = vpack.c.b16 %v1274, %v1273
      %v1304 = vpack.c.b16 %v1276, %v1275
      %v1305 = vpack.c.b16 %v1278, %v1277
      %v1306 = vpack.c.b16 %v1280, %v1279
      %v1307 = vpack.c.b16 %v1282, %v1281
      %v1308 = vpack.c.b16 %v1284, %v1283
      %1333 = vmatpush.bf16.msra.mxu0 %v1292
      %1334 = vmatpush.bf16.msra.mxu0 %v1291
      %1335 = vmatpush.bf16.msra.mxu0 %v1290
      %1336 = vmatpush.bf16.msra.mxu0 %v1289
      %1337 = vmatpush.bf16.msra.mxu0 %v1288
      %1338 = vmatpush.bf16.msra.mxu0 %v1287
      %1339 = vmatpush.bf16.msra.mxu0 %v1286
      %1340 = vmatpush.bf16.msra.mxu0 %v1285
      %1341 = vmatmul.bf16.gmra.mxu0 %v313
      %v1342 = vpop.f32.mrf.mxu0
      %v1343 = vadd.f32 0.0, %v1342
      %v1344 = vpop.f32.mrf.mxu0
      %v1345 = vadd.f32 0.0, %v1344
      %1346 = vmatmul.bf16.gmra.mxu0 %v314
      %v1347 = vpop.f32.mrf.mxu0
      %v1348 = vadd.f32 0.0, %v1347
      %v1349 = vpop.f32.mrf.mxu0
      %v1350 = vadd.f32 0.0, %v1349
      %1351 = vmatmul.bf16.gmra.mxu0 %v315
      %v1352 = vpop.f32.mrf.mxu0
      %v1353 = vadd.f32 0.0, %v1352
      %v1354 = vpop.f32.mrf.mxu0
      %v1355 = vadd.f32 0.0, %v1354
      %1356 = vmatmul.bf16.gmra.mxu0 %v316
      %v1357 = vpop.f32.mrf.mxu0
      %v1358 = vadd.f32 0.0, %v1357
      %v1359 = vpop.f32.mrf.mxu0
      %v1360 = vadd.f32 0.0, %v1359
      %1361 = vmatmul.bf16.gmra.mxu0 %v317
      %v1362 = vpop.f32.mrf.mxu0
      %v1363 = vadd.f32 0.0, %v1362
      %v1364 = vpop.f32.mrf.mxu0
      %v1365 = vadd.f32 0.0, %v1364
      %1366 = vmatmul.bf16.gmra.mxu0 %v318
      %v1367 = vpop.f32.mrf.mxu0
      %v1368 = vadd.f32 0.0, %v1367
      %v1369 = vpop.f32.mrf.mxu0
      %v1370 = vadd.f32 0.0, %v1369
      %1371 = vmatmul.bf16.gmra.mxu0 %v319
      %v1372 = vpop.f32.mrf.mxu0
      %v1373 = vadd.f32 0.0, %v1372
      %v1374 = vpop.f32.mrf.mxu0
      %v1375 = vadd.f32 0.0, %v1374
      %1376 = vmatmul.bf16.gmra.mxu0 %v320
      %v1377 = vpop.f32.mrf.mxu0
      %v1378 = vadd.f32 0.0, %v1377
      %v1379 = vpop.f32.mrf.mxu0
      %v1380 = vadd.f32 0.0, %v1379
      %1381 = vdwg.mxu0
      %1382 = vmatpush.bf16.msra.mxu0 %v1300
      %1383 = vmatpush.bf16.msra.mxu0 %v1299
      %1384 = vmatpush.bf16.msra.mxu0 %v1298
      %1385 = vmatpush.bf16.msra.mxu0 %v1297
      %1386 = vmatpush.bf16.msra.mxu0 %v1296
      %1387 = vmatpush.bf16.msra.mxu0 %v1295
      %1388 = vmatpush.bf16.msra.mxu0 %v1294
      %1389 = vmatpush.bf16.msra.mxu0 %v1293
      %1390 = vmatmul.bf16.gmra.mxu0 %v362
      %v1391 = vpop.f32.mrf.mxu0
      %v1392 = vadd.f32 %v1343, %v1391
      %v1393 = vpop.f32.mrf.mxu0
      %v1394 = vadd.f32 %v1345, %v1393
      %1395 = vmatmul.bf16.gmra.mxu0 %v370
      %v1396 = vpop.f32.mrf.mxu0
      %v1397 = vadd.f32 %v1348, %v1396
      %v1398 = vpop.f32.mrf.mxu0
      %v1399 = vadd.f32 %v1350, %v1398
      %1400 = vmatmul.bf16.gmra.mxu0 %v378
      %v1401 = vpop.f32.mrf.mxu0
      %v1402 = vadd.f32 %v1353, %v1401
      %v1403 = vpop.f32.mrf.mxu0
      %v1404 = vadd.f32 %v1355, %v1403
      %1405 = vmatmul.bf16.gmra.mxu0 %v386
      %v1406 = vpop.f32.mrf.mxu0
      %v1407 = vadd.f32 %v1358, %v1406
      %v1408 = vpop.f32.mrf.mxu0
      %v1409 = vadd.f32 %v1360, %v1408
      %1410 = vmatmul.bf16.gmra.mxu0 %v394
      %v1411 = vpop.f32.mrf.mxu0
      %v1412 = vadd.f32 %v1363, %v1411
      %v1413 = vpop.f32.mrf.mxu0
      %v1414 = vadd.f32 %v1365, %v1413
      %1415 = vmatmul.bf16.gmra.mxu0 %v402
      %v1416 = vpop.f32.mrf.mxu0
      %v1417 = vadd.f32 %v1368, %v1416
      %v1418 = vpop.f32.mrf.mxu0
      %v1419 = vadd.f32 %v1370, %v1418
      %1420 = vmatmul.bf16.gmra.mxu0 %v410
      %v1421 = vpop.f32.mrf.mxu0
      %v1422 = vadd.f32 %v1373, %v1421
      %v1423 = vpop.f32.mrf.mxu0
      %v1424 = vadd.f32 %v1375, %v1423
      %1425 = vmatmul.bf16.gmra.mxu0 %v418
      %v1426 = vpop.f32.mrf.mxu0
      %v1427 = vadd.f32 %v1378, %v1426
      %v1428 = vpop.f32.mrf.mxu0
      %v1429 = vadd.f32 %v1380, %v1428
      %1430 = vdwg.mxu0
      %1431 = vmatpush.bf16.msra.mxu0 %v1308
      %1432 = vmatpush.bf16.msra.mxu0 %v1307
      %1433 = vmatpush.bf16.msra.mxu0 %v1306
      %1434 = vmatpush.bf16.msra.mxu0 %v1305
      %1435 = vmatpush.bf16.msra.mxu0 %v1304
      %1436 = vmatpush.bf16.msra.mxu0 %v1303
      %1437 = vmatpush.bf16.msra.mxu0 %v1302
      %1438 = vmatpush.bf16.msra.mxu0 %v1301
      %1439 = vmatmul.bf16.gmra.mxu0 %v436
      %v1440 = vpop.f32.mrf.mxu0
      %v1441 = vadd.f32 %v1392, %v1440
      %v1442 = vpop.f32.mrf.mxu0
      %v1443 = vadd.f32 %v1394, %v1442
      %1444 = vmatmul.bf16.gmra.mxu0 %v438
      %v1445 = vpop.f32.mrf.mxu0
      %v1446 = vadd.f32 %v1397, %v1445
      %v1447 = vpop.f32.mrf.mxu0
      %v1448 = vadd.f32 %v1399, %v1447
      %1449 = vmatmul.bf16.gmra.mxu0 %v440
      %v1450 = vpop.f32.mrf.mxu0
      %v1451 = vadd.f32 %v1402, %v1450
      %v1452 = vpop.f32.mrf.mxu0
      %v1453 = vadd.f32 %v1404, %v1452
      %1454 = vmatmul.bf16.gmra.mxu0 %v442
      %v1455 = vpop.f32.mrf.mxu0
      %v1456 = vadd.f32 %v1407, %v1455
      %v1457 = vpop.f32.mrf.mxu0
      %v1458 = vadd.f32 %v1409, %v1457
      %1459 = vmatmul.bf16.gmra.mxu0 %v444
      %v1460 = vpop.f32.mrf.mxu0
      %v1461 = vadd.f32 %v1412, %v1460
      %v1462 = vpop.f32.mrf.mxu0
      %v1463 = vadd.f32 %v1414, %v1462
      %1464 = vmatmul.bf16.gmra.mxu0 %v446
      %v1465 = vpop.f32.mrf.mxu0
      %v1466 = vadd.f32 %v1417, %v1465
      %v1467 = vpop.f32.mrf.mxu0
      %v1468 = vadd.f32 %v1419, %v1467
      %1469 = vmatmul.bf16.gmra.mxu0 %v448
      %v1470 = vpop.f32.mrf.mxu0
      %v1471 = vadd.f32 %v1422, %v1470
      %v1472 = vpop.f32.mrf.mxu0
      %v1473 = vadd.f32 %v1424, %v1472
      %1474 = vmatmul.bf16.gmra.mxu0 %v450
      %v1475 = vpop.f32.mrf.mxu0
      %v1476 = vadd.f32 %v1427, %v1475
      %v1477 = vpop.f32.mrf.mxu0
      %v1478 = vadd.f32 %v1429, %v1477
      %1479 = vdwg.mxu0
      %v1480 = vadd.f32 %v1101, %v1441
      %v1481 = vadd.f32 %v1103, %v1443
      %v1482 = vadd.f32 %v1106, %v1446
      %v1483 = vadd.f32 %v1108, %v1448
      %v1484 = vadd.f32 %v1111, %v1451
      %v1485 = vadd.f32 %v1113, %v1453
      %v1486 = vadd.f32 %v1116, %v1456
      %v1487 = vadd.f32 %v1118, %v1458
      %v1488 = vadd.f32 %v1121, %v1461
      %v1489 = vadd.f32 %v1123, %v1463
      %v1490 = vadd.f32 %v1126, %v1466
      %v1491 = vadd.f32 %v1128, %v1468
      %v1492 = vadd.f32 %v1131, %v1471
      %v1493 = vadd.f32 %v1133, %v1473
      %v1494 = vadd.f32 %v1136, %v1476
      %v1495 = vadd.f32 %v1138, %v1478
      %v1496 = vld [vmem:[%s2] sm:$0x1]
      %v1497 = vperm.slane %v1496, 0
      %v1498 = vmul.f32 %v1480, %v1497
      %v1499 = vmul.f32 %v1481, %v1497
      %v1500 = vmul.f32 %v1482, %v1497
      %v1501 = vmul.f32 %v1483, %v1497
      %v1502 = vmul.f32 %v1484, %v1497
      %v1503 = vmul.f32 %v1485, %v1497
      %v1504 = vmul.f32 %v1486, %v1497
      %v1505 = vmul.f32 %v1487, %v1497
      %v1506 = vmul.f32 %v1488, %v1497
      %v1507 = vmul.f32 %v1489, %v1497
      %v1508 = vmul.f32 %v1490, %v1497
      %v1509 = vmul.f32 %v1491, %v1497
      %v1510 = vmul.f32 %v1492, %v1497
      %v1511 = vmul.f32 %v1493, %v1497
      %v1512 = vmul.f32 %v1494, %v1497
      %v1513 = vmul.f32 %v1495, %v1497
      %v1514 = vld [vmem:[%s2 + $0x1] sm:$0x1]
      %v1515 = vperm.slane %v1514, 0
      %v1516 = vadd.f32 %v1498, %v1515
      %v1517 = vadd.f32 %v1499, %v1515
      %v1518 = vadd.f32 %v1500, %v1515
      %v1519 = vadd.f32 %v1501, %v1515
      %v1520 = vadd.f32 %v1502, %v1515
      %v1521 = vadd.f32 %v1503, %v1515
      %v1522 = vadd.f32 %v1504, %v1515
      %v1523 = vadd.f32 %v1505, %v1515
      %v1524 = vadd.f32 %v1506, %v1515
      %v1525 = vadd.f32 %v1507, %v1515
      %v1526 = vadd.f32 %v1508, %v1515
      %v1527 = vadd.f32 %v1509, %v1515
      %v1528 = vadd.f32 %v1510, %v1515
      %v1529 = vadd.f32 %v1511, %v1515
      %v1530 = vadd.f32 %v1512, %v1515
      %v1531 = vadd.f32 %v1513, %v1515
      %v1532 = vsub.f32 0.0, %v1516
      %v1533 = vsub.f32 0.0, %v1517
      %v1534 = vsub.f32 0.0, %v1518
      %v1535 = vsub.f32 0.0, %v1519
      %v1536 = vsub.f32 0.0, %v1520
      %v1537 = vsub.f32 0.0, %v1521
      %v1538 = vsub.f32 0.0, %v1522
      %v1539 = vsub.f32 0.0, %v1523
      %v1540 = vsub.f32 0.0, %v1524
      %v1541 = vsub.f32 0.0, %v1525
      %v1542 = vsub.f32 0.0, %v1526
      %v1543 = vsub.f32 0.0, %v1527
      %v1544 = vsub.f32 0.0, %v1528
      %v1545 = vsub.f32 0.0, %v1529
      %v1546 = vsub.f32 0.0, %v1530
      %v1547 = vsub.f32 0.0, %v1531
      %v1548 = vmul.f32 %v1532, 1.442695
      %v1549 = vpow.pop %v1548
      %v1550 = vmul.f32 %v1533, 1.442695
      %v1551 = vpow.pop %v1550
      %v1552 = vmul.f32 %v1534, 1.442695
      %v1553 = vpow.pop %v1552
      %v1554 = vmul.f32 %v1535, 1.442695
      %v1555 = vpow.pop %v1554
      %v1556 = vmul.f32 %v1536, 1.442695
      %v1557 = vpow.pop %v1556
      %v1558 = vmul.f32 %v1537, 1.442695
      %v1559 = vpow.pop %v1558
      %v1560 = vmul.f32 %v1538, 1.442695
      %v1561 = vpow.pop %v1560
      %v1562 = vmul.f32 %v1539, 1.442695
      %v1563 = vpow.pop %v1562
      %v1564 = vmul.f32 %v1540, 1.442695
      %v1565 = vpow.pop %v1564
      %v1566 = vmul.f32 %v1541, 1.442695
      %v1567 = vpow.pop %v1566
      %v1568 = vmul.f32 %v1542, 1.442695
      %v1569 = vpow.pop %v1568
      %v1570 = vmul.f32 %v1543, 1.442695
      %v1571 = vpow.pop %v1570
      %v1572 = vmul.f32 %v1544, 1.442695
      %v1573 = vpow.pop %v1572
      %v1574 = vmul.f32 %v1545, 1.442695
      %v1575 = vpow.pop %v1574
      %v1576 = vmul.f32 %v1546, 1.442695
      %v1577 = vpow.pop %v1576
      %v1578 = vmul.f32 %v1547, 1.442695
      %v1579 = vpow.pop %v1578
      %v1580 = vadd.f32 %v1549, 1.0
      %v1581 = vadd.f32 %v1551, 1.0
      %v1582 = vadd.f32 %v1553, 1.0
      %v1583 = vadd.f32 %v1555, 1.0
      %v1584 = vadd.f32 %v1557, 1.0
      %v1585 = vadd.f32 %v1559, 1.0
      %v1586 = vadd.f32 %v1561, 1.0
      %v1587 = vadd.f32 %v1563, 1.0
      %v1588 = vadd.f32 %v1565, 1.0
      %v1589 = vadd.f32 %v1567, 1.0
      %v1590 = vadd.f32 %v1569, 1.0
      %v1591 = vadd.f32 %v1571, 1.0
      %v1592 = vadd.f32 %v1573, 1.0
      %v1593 = vadd.f32 %v1575, 1.0
      %v1594 = vadd.f32 %v1577, 1.0
      %v1595 = vadd.f32 %v1579, 1.0
      %v1596 = vrcp.pop %v1580
      %v1597 = vmul.f32 %v1580, %v1596
      %v1598 = vsub.f32 1.0, %v1597
      %v1599 = vmul.f32 %v1596, %v1598
      %v1600 = vadd.f32 %v1596, %v1599
      %vm1601 = vweird.f32 %v1580
      %vm1602 = vweird.f32 %v1596
      %vm1603 = vmor %vm1601, %vm1602
      %v1604 = vsel %vm1603, %v1596, %v1600
      %v1605 = vand.u32 2147483647, %v1580
      %vm1606 = vcmp.eq.f32.partialorder %v1605, 8.507059e+37
      %v1607 = vand.u32 %v1580, 2147483648
      %v1608 = vor.u32 1.1754944e-38, %v1607
      %v1609 = vsel %vm1606, %v1608, %v1604
      %v1610 = vmul.f32 1.0, %v1609
      %v1611 = vrcp.pop %v1581
      %v1612 = vmul.f32 %v1581, %v1611
      %v1613 = vsub.f32 1.0, %v1612
      %v1614 = vmul.f32 %v1611, %v1613
      %v1615 = vadd.f32 %v1611, %v1614
      %vm1616 = vweird.f32 %v1581
      %vm1617 = vweird.f32 %v1611
      %vm1618 = vmor %vm1616, %vm1617
      %v1619 = vsel %vm1618, %v1611, %v1615
      %v1620 = vand.u32 2147483647, %v1581
      %vm1621 = vcmp.eq.f32.partialorder %v1620, 8.507059e+37
      %v1622 = vand.u32 %v1581, 2147483648
      %v1623 = vor.u32 1.1754944e-38, %v1622
      %v1624 = vsel %vm1621, %v1623, %v1619
      %v1625 = vmul.f32 1.0, %v1624
      %v1626 = vrcp.pop %v1582
      %v1627 = vmul.f32 %v1582, %v1626
      %v1628 = vsub.f32 1.0, %v1627
      %v1629 = vmul.f32 %v1626, %v1628
      %v1630 = vadd.f32 %v1626, %v1629
      %vm1631 = vweird.f32 %v1582
      %vm1632 = vweird.f32 %v1626
      %vm1633 = vmor %vm1631, %vm1632
      %v1634 = vsel %vm1633, %v1626, %v1630
      %v1635 = vand.u32 2147483647, %v1582
      %vm1636 = vcmp.eq.f32.partialorder %v1635, 8.507059e+37
      %v1637 = vand.u32 %v1582, 2147483648
      %v1638 = vor.u32 1.1754944e-38, %v1637
      %v1639 = vsel %vm1636, %v1638, %v1634
      %v1640 = vmul.f32 1.0, %v1639
      %v1641 = vrcp.pop %v1583
      %v1642 = vmul.f32 %v1583, %v1641
      %v1643 = vsub.f32 1.0, %v1642
      %v1644 = vmul.f32 %v1641, %v1643
      %v1645 = vadd.f32 %v1641, %v1644
      %vm1646 = vweird.f32 %v1583
      %vm1647 = vweird.f32 %v1641
      %vm1648 = vmor %vm1646, %vm1647
      %v1649 = vsel %vm1648, %v1641, %v1645
      %v1650 = vand.u32 2147483647, %v1583
      %vm1651 = vcmp.eq.f32.partialorder %v1650, 8.507059e+37
      %v1652 = vand.u32 %v1583, 2147483648
      %v1653 = vor.u32 1.1754944e-38, %v1652
      %v1654 = vsel %vm1651, %v1653, %v1649
      %v1655 = vmul.f32 1.0, %v1654
      %v1656 = vrcp.pop %v1584
      %v1657 = vmul.f32 %v1584, %v1656
      %v1658 = vsub.f32 1.0, %v1657
      %v1659 = vmul.f32 %v1656, %v1658
      %v1660 = vadd.f32 %v1656, %v1659
      %vm1661 = vweird.f32 %v1584
      %vm1662 = vweird.f32 %v1656
      %vm1663 = vmor %vm1661, %vm1662
      %v1664 = vsel %vm1663, %v1656, %v1660
      %v1665 = vand.u32 2147483647, %v1584
      %vm1666 = vcmp.eq.f32.partialorder %v1665, 8.507059e+37
      %v1667 = vand.u32 %v1584, 2147483648
      %v1668 = vor.u32 1.1754944e-38, %v1667
      %v1669 = vsel %vm1666, %v1668, %v1664
      %v1670 = vmul.f32 1.0, %v1669
      %v1671 = vrcp.pop %v1585
      %v1672 = vmul.f32 %v1585, %v1671
      %v1673 = vsub.f32 1.0, %v1672
      %v1674 = vmul.f32 %v1671, %v1673
      %v1675 = vadd.f32 %v1671, %v1674
      %vm1676 = vweird.f32 %v1585
      %vm1677 = vweird.f32 %v1671
      %vm1678 = vmor %vm1676, %vm1677
      %v1679 = vsel %vm1678, %v1671, %v1675
      %v1680 = vand.u32 2147483647, %v1585
      %vm1681 = vcmp.eq.f32.partialorder %v1680, 8.507059e+37
      %v1682 = vand.u32 %v1585, 2147483648
      %v1683 = vor.u32 1.1754944e-38, %v1682
      %v1684 = vsel %vm1681, %v1683, %v1679
      %v1685 = vmul.f32 1.0, %v1684
      %v1686 = vrcp.pop %v1586
      %v1687 = vmul.f32 %v1586, %v1686
      %v1688 = vsub.f32 1.0, %v1687
      %v1689 = vmul.f32 %v1686, %v1688
      %v1690 = vadd.f32 %v1686, %v1689
      %vm1691 = vweird.f32 %v1586
      %vm1692 = vweird.f32 %v1686
      %vm1693 = vmor %vm1691, %vm1692
      %v1694 = vsel %vm1693, %v1686, %v1690
      %v1695 = vand.u32 2147483647, %v1586
      %vm1696 = vcmp.eq.f32.partialorder %v1695, 8.507059e+37
      %v1697 = vand.u32 %v1586, 2147483648
      %v1698 = vor.u32 1.1754944e-38, %v1697
      %v1699 = vsel %vm1696, %v1698, %v1694
      %v1700 = vmul.f32 1.0, %v1699
      %v1701 = vrcp.pop %v1587
      %v1702 = vmul.f32 %v1587, %v1701
      %v1703 = vsub.f32 1.0, %v1702
      %v1704 = vmul.f32 %v1701, %v1703
      %v1705 = vadd.f32 %v1701, %v1704
      %vm1706 = vweird.f32 %v1587
      %vm1707 = vweird.f32 %v1701
      %vm1708 = vmor %vm1706, %vm1707
      %v1709 = vsel %vm1708, %v1701, %v1705
      %v1710 = vand.u32 2147483647, %v1587
      %vm1711 = vcmp.eq.f32.partialorder %v1710, 8.507059e+37
      %v1712 = vand.u32 %v1587, 2147483648
      %v1713 = vor.u32 1.1754944e-38, %v1712
      %v1714 = vsel %vm1711, %v1713, %v1709
      %v1715 = vmul.f32 1.0, %v1714
      %v1716 = vrcp.pop %v1588
      %v1717 = vmul.f32 %v1588, %v1716
      %v1718 = vsub.f32 1.0, %v1717
      %v1719 = vmul.f32 %v1716, %v1718
      %v1720 = vadd.f32 %v1716, %v1719
      %vm1721 = vweird.f32 %v1588
      %vm1722 = vweird.f32 %v1716
      %vm1723 = vmor %vm1721, %vm1722
      %v1724 = vsel %vm1723, %v1716, %v1720
      %v1725 = vand.u32 2147483647, %v1588
      %vm1726 = vcmp.eq.f32.partialorder %v1725, 8.507059e+37
      %v1727 = vand.u32 %v1588, 2147483648
      %v1728 = vor.u32 1.1754944e-38, %v1727
      %v1729 = vsel %vm1726, %v1728, %v1724
      %v1730 = vmul.f32 1.0, %v1729
      %v1731 = vrcp.pop %v1589
      %v1732 = vmul.f32 %v1589, %v1731
      %v1733 = vsub.f32 1.0, %v1732
      %v1734 = vmul.f32 %v1731, %v1733
      %v1735 = vadd.f32 %v1731, %v1734
      %vm1736 = vweird.f32 %v1589
      %vm1737 = vweird.f32 %v1731
      %vm1738 = vmor %vm1736, %vm1737
      %v1739 = vsel %vm1738, %v1731, %v1735
      %v1740 = vand.u32 2147483647, %v1589
      %vm1741 = vcmp.eq.f32.partialorder %v1740, 8.507059e+37
      %v1742 = vand.u32 %v1589, 2147483648
      %v1743 = vor.u32 1.1754944e-38, %v1742
      %v1744 = vsel %vm1741, %v1743, %v1739
      %v1745 = vmul.f32 1.0, %v1744
      %v1746 = vrcp.pop %v1590
      %v1747 = vmul.f32 %v1590, %v1746
      %v1748 = vsub.f32 1.0, %v1747
      %v1749 = vmul.f32 %v1746, %v1748
      %v1750 = vadd.f32 %v1746, %v1749
      %vm1751 = vweird.f32 %v1590
      %vm1752 = vweird.f32 %v1746
      %vm1753 = vmor %vm1751, %vm1752
      %v1754 = vsel %vm1753, %v1746, %v1750
      %v1755 = vand.u32 2147483647, %v1590
      %vm1756 = vcmp.eq.f32.partialorder %v1755, 8.507059e+37
      %v1757 = vand.u32 %v1590, 2147483648
      %v1758 = vor.u32 1.1754944e-38, %v1757
      %v1759 = vsel %vm1756, %v1758, %v1754
      %v1760 = vmul.f32 1.0, %v1759
      %v1761 = vrcp.pop %v1591
      %v1762 = vmul.f32 %v1591, %v1761
      %v1763 = vsub.f32 1.0, %v1762
      %v1764 = vmul.f32 %v1761, %v1763
      %v1765 = vadd.f32 %v1761, %v1764
      %vm1766 = vweird.f32 %v1591
      %vm1767 = vweird.f32 %v1761
      %vm1768 = vmor %vm1766, %vm1767
      %v1769 = vsel %vm1768, %v1761, %v1765
      %v1770 = vand.u32 2147483647, %v1591
      %vm1771 = vcmp.eq.f32.partialorder %v1770, 8.507059e+37
      %v1772 = vand.u32 %v1591, 2147483648
      %v1773 = vor.u32 1.1754944e-38, %v1772
      %v1774 = vsel %vm1771, %v1773, %v1769
      %v1775 = vmul.f32 1.0, %v1774
      %v1776 = vrcp.pop %v1592
      %v1777 = vmul.f32 %v1592, %v1776
      %v1778 = vsub.f32 1.0, %v1777
      %v1779 = vmul.f32 %v1776, %v1778
      %v1780 = vadd.f32 %v1776, %v1779
      %vm1781 = vweird.f32 %v1592
      %vm1782 = vweird.f32 %v1776
      %vm1783 = vmor %vm1781, %vm1782
      %v1784 = vsel %vm1783, %v1776, %v1780
      %v1785 = vand.u32 2147483647, %v1592
      %vm1786 = vcmp.eq.f32.partialorder %v1785, 8.507059e+37
      %v1787 = vand.u32 %v1592, 2147483648
      %v1788 = vor.u32 1.1754944e-38, %v1787
      %v1789 = vsel %vm1786, %v1788, %v1784
      %v1790 = vmul.f32 1.0, %v1789
      %v1791 = vrcp.pop %v1593
      %v1792 = vmul.f32 %v1593, %v1791
      %v1793 = vsub.f32 1.0, %v1792
      %v1794 = vmul.f32 %v1791, %v1793
      %v1795 = vadd.f32 %v1791, %v1794
      %vm1796 = vweird.f32 %v1593
      %vm1797 = vweird.f32 %v1791
      %vm1798 = vmor %vm1796, %vm1797
      %v1799 = vsel %vm1798, %v1791, %v1795
      %v1800 = vand.u32 2147483647, %v1593
      %vm1801 = vcmp.eq.f32.partialorder %v1800, 8.507059e+37
      %v1802 = vand.u32 %v1593, 2147483648
      %v1803 = vor.u32 1.1754944e-38, %v1802
      %v1804 = vsel %vm1801, %v1803, %v1799
      %v1805 = vmul.f32 1.0, %v1804
      %v1806 = vrcp.pop %v1594
      %v1807 = vmul.f32 %v1594, %v1806
      %v1808 = vsub.f32 1.0, %v1807
      %v1809 = vmul.f32 %v1806, %v1808
      %v1810 = vadd.f32 %v1806, %v1809
      %vm1811 = vweird.f32 %v1594
      %vm1812 = vweird.f32 %v1806
      %vm1813 = vmor %vm1811, %vm1812
      %v1814 = vsel %vm1813, %v1806, %v1810
      %v1815 = vand.u32 2147483647, %v1594
      %vm1816 = vcmp.eq.f32.partialorder %v1815, 8.507059e+37
      %v1817 = vand.u32 %v1594, 2147483648
      %v1818 = vor.u32 1.1754944e-38, %v1817
      %v1819 = vsel %vm1816, %v1818, %v1814
      %v1820 = vmul.f32 1.0, %v1819
      %v1821 = vrcp.pop %v1595
      %v1822 = vmul.f32 %v1595, %v1821
      %v1823 = vsub.f32 1.0, %v1822
      %v1824 = vmul.f32 %v1821, %v1823
      %v1825 = vadd.f32 %v1821, %v1824
      %vm1826 = vweird.f32 %v1595
      %vm1827 = vweird.f32 %v1821
      %vm1828 = vmor %vm1826, %vm1827
      %v1829 = vsel %vm1828, %v1821, %v1825
      %v1830 = vand.u32 2147483647, %v1595
      %vm1831 = vcmp.eq.f32.partialorder %v1830, 8.507059e+37
      %v1832 = vand.u32 %v1595, 2147483648
      %v1833 = vor.u32 1.1754944e-38, %v1832
      %v1834 = vsel %vm1831, %v1833, %v1829
      %v1835 = vmul.f32 1.0, %v1834
      %v1836 = vmul.f32 %v1516, %v1610
      %v1837 = vmul.f32 %v1517, %v1625
      %v1838 = vmul.f32 %v1518, %v1640
      %v1839 = vmul.f32 %v1519, %v1655
      %v1840 = vmul.f32 %v1520, %v1670
      %v1841 = vmul.f32 %v1521, %v1685
      %v1842 = vmul.f32 %v1522, %v1700
      %v1843 = vmul.f32 %v1523, %v1715
      %v1844 = vmul.f32 %v1524, %v1730
      %v1845 = vmul.f32 %v1525, %v1745
      %v1846 = vmul.f32 %v1526, %v1760
      %v1847 = vmul.f32 %v1527, %v1775
      %v1848 = vmul.f32 %v1528, %v1790
      %v1849 = vmul.f32 %v1529, %v1805
      %v1850 = vmul.f32 %v1530, %v1820
      %v1851 = vmul.f32 %v1531, %v1835
      %v1852 = vpack.c.bf16 %v1836, %v1836
      %v1853 = vpack.c.bf16 %v1837, %v1837
      %v1854 = vpack.c.bf16 %v1838, %v1838
      %v1855 = vpack.c.bf16 %v1839, %v1839
      %v1856 = vpack.c.bf16 %v1840, %v1840
      %v1857 = vpack.c.bf16 %v1841, %v1841
      %v1858 = vpack.c.bf16 %v1842, %v1842
      %v1859 = vpack.c.bf16 %v1843, %v1843
      %v1860 = vpack.c.bf16 %v1844, %v1844
      %v1861 = vpack.c.bf16 %v1845, %v1845
      %v1862 = vpack.c.bf16 %v1846, %v1846
      %v1863 = vpack.c.bf16 %v1847, %v1847
      %v1864 = vpack.c.bf16 %v1848, %v1848
      %v1865 = vpack.c.bf16 %v1849, %v1849
      %v1866 = vpack.c.bf16 %v1850, %v1850
      %v1867 = vpack.c.bf16 %v1851, %v1851
      %1868 = vst [vmem:[%s206] sm:$0xf] %v1852
      %1869 = vst [vmem:[%s206 + $0x4] sm:$0xf] %v1853
      %1870 = vst [vmem:[%s206 + $0x8] sm:$0xf] %v1854
      %1871 = vst [vmem:[%s206 + $0xc] sm:$0xf] %v1855
      %1872 = vst [vmem:[%s206 + $0x10] sm:$0xf] %v1856
      %1873 = vst [vmem:[%s206 + $0x14] sm:$0xf] %v1857
      %1874 = vst [vmem:[%s206 + $0x18] sm:$0xf] %v1858
      %1875 = vst [vmem:[%s206 + $0x1c] sm:$0xf] %v1859
      %1876 = vst [vmem:[%s206 + $0x20] sm:$0xf] %v1860
      %1877 = vst [vmem:[%s206 + $0x24] sm:$0xf] %v1861
      %1878 = vst [vmem:[%s206 + $0x28] sm:$0xf] %v1862
      %1879 = vst [vmem:[%s206 + $0x2c] sm:$0xf] %v1863
      %1880 = vst [vmem:[%s206 + $0x30] sm:$0xf] %v1864
      %1881 = vst [vmem:[%s206 + $0x34] sm:$0xf] %v1865
      %1882 = vst [vmem:[%s206 + $0x38] sm:$0xf] %v1866
      %1883 = vst [vmem:[%s206 + $0x3c] sm:$0xf] %v1867
      %s1884 = smul.u32 16, %s19
      %p1885 = scmp.lt.s32.totalorder %s18, 1
      %s1886 = scalar_select %p1885, %s18, 1
      %p1887 = scmp.lt.s32.totalorder %s1884, 15
      %s1888 = scalar_select %p1887, %s1884, 15
      %s1889 = smul.addr %s1886, 16
      %s1890 = sadd.s32 %s1888, %s1889
      %s1891 = smul.addr %s1890, 4
      %s1892 = scalar_lea.vmem %s3, %s1891
      // Predicated region
      $region33: #{spdconv.1} parent=31 // pred_check
        %p1893 = pneg %p116
      $region34: #{spdconv.1} parent=31 // pred_check_branch
        %1895 = sbr.rel (%p1893) target = $region36
      $region35: #{spdconv.1} parent=31 // pred_region
        %s1896 = smul.u32 16, %s19
      $region36: #{spdconv.1} parent=31 // pred_fallthru
        _
    $region32: #{spdconv.1} parent=5 // pred_fallthru
      _
    %p1897 = scmp.le.s32.totalorder 2, %s9
    // Predicated region
    $region37: #{spdconv.1} parent=5 // pred_check
      %p1898 = pneg %p1897
    $region38: #{spdconv.1} parent=5 // pred_check_branch
      %1900 = sbr.rel (%p1898) target = $region40
    $region39: #{spdconv.1} parent=5 // pred_region
      %s1901 = ssub.s32 %s9, 2
      // Predicated region
      $region41: #{spdconv.1} parent=39 // pred_check
        %p1902 = pneg %p122
      $region42: #{spdconv.1} parent=39 // pred_check_branch
        %1904 = sbr.rel (%p1902) target = $region44
      $region43: #{spdconv.1} parent=39 // pred_region
        %s1905 = smul.u32 16, %s21
        %p1906 = scmp.lt.s32.totalorder %s20, 1
        %s1907 = scalar_select %p1906, %s20, 1
        %p1908 = scmp.lt.s32.totalorder %s1905, 15
        %s1909 = scalar_select %p1908, %s1905, 15
        %s1910 = smul.addr %s1907, 16
        %s1911 = sadd.s32 %s1909, %s1910
        %s1912 = smul.addr %s1911, 4
        %s1913 = scalar_lea.vmem %s3, %s1912
      $region44: #{spdconv.1} parent=39 // pred_fallthru
        _
    $region40: #{spdconv.1} parent=5 // pred_fallthru
      _
  $region6: #{spdconv.1} parent=0 // loop_footer
    %s13 = sadd.s32 1, %s9
  $region7: #{spdconv.1} parent=0 // loop_footer_branch
    %8 = sbr.rel target = $region3
  $region8: #{spdconv.1} parent=0 // loop_exit
    _

</llo_original>
